<compile_context>
chip_gen: v5e
topology: v5e:2x2
jax: 0.10.0
libtpu: 0.0.40
codegen_flags: <defaults>
</compile_context>

<pallas_src>
from functools import partial

import jax
import jax.numpy as jnp
from jax.experimental import pallas as pl
from jax.experimental.pallas import tpu as pltpu

M = 3            # number of branches (kernel sizes 3, 5, 7)
P7 = 3           # max padding / tap radius of the 7x7 superset grid
BN_EPS = 1e-5
LANE = 128
SUBL_BF16 = 16   # bf16 sublane tile height


def _round_up(v, m):
    return (v + m - 1) // m * m


def sknet_kernel(x4_ref, wall_ref, scale_ref, bias_ref, mask_ref,
                 wfold_ref, bfold_ref, out_ref,
                 patch_ref, feas_ref, *, C, Wc, F, L, inv_hw, rep, kwp):
    """One batch element per grid step.  L = lane-padded flat canvas length.

    x4_ref   : (1, rep*C, Lext) bf16  zero-extended flat canvas, replicated `rep`
                                      times along channels, copy j pre-shifted by
                                      +j lanes -> a group of `rep` consecutive kw
                                      taps is one full-sublane-tile slice.
    wall_ref : (3C, 7*kwp*C) bf16     all 3 branch convs zero-scattered into the
                                      7 x kwp tap grid (fused matmul LHS).
    scale_ref/bias_ref : (3C, 1) f32  folded BN (incl. conv bias) scale / bias.
    mask_ref : (1, L) f32             1.0 at valid canvas positions (mean pool).
    wfold_ref: (3C, C) f32, bfold_ref: (3C, 1) f32  squeeze+excitation FCs folded.
    out_ref  : (1, C, L) f32
    patch_ref: (7*kwp*C, L) bf16      shared 49-tap im2col buffer.
    feas_ref : (3C, L) bf16           per-branch post-BN/ReLU features.
    """
    groups_per_row = kwp // rep
    n_groups = 7 * groups_per_row

    # ---- im2col: every group is one aligned full-tile (rep*C, L) load + store.
    for g in range(n_groups):
        kh = g // groups_per_row
        kw0 = (g % groups_per_row) * rep            # first kw tap of this group
        s = F + (kh - P7) * Wc + (kw0 - P7)         # static lane offset
        patch_ref[g * rep * C:(g + 1) * rep * C, :] = x4_ref[0, :, s:s + L]

    # ---- all three branch convolutions in ONE MXU matmul (contraction 7*kwp*C).
    conv = jnp.dot(wall_ref[...], patch_ref[...],
                   preferred_element_type=jnp.float32)          # (3C, L) f32
    # folded eval-mode BatchNorm + ReLU (lane-dense VPU work)
    fea_all = jnp.maximum(conv * scale_ref[...] + bias_ref[...], 0.0)
    feas_ref[...] = fea_all.astype(jnp.bfloat16)

    # ---- squeeze: masked global average pool over valid spatial positions.
    fea_U = fea_all[0:C] + fea_all[C:2 * C] + fea_all[2 * C:3 * C]      # (C, L)
    fea_s = jnp.sum(fea_U * mask_ref[...], axis=1, keepdims=True) * inv_hw  # (C, 1)

    # ---- excitation: fc + fcs folded host-side into one (3C, C) @ (C, 1) matmul.
    logits = jnp.dot(wfold_ref[...], fea_s,
                     preferred_element_type=jnp.float32) + bfold_ref[...]   # (3C, 1)
    lg = [logits[i * C:(i + 1) * C, :] for i in range(M)]
    mx = jnp.maximum(jnp.maximum(lg[0], lg[1]), lg[2])
    ex = [jnp.exp(v - mx) for v in lg]
    denom = ex[0] + ex[1] + ex[2]
    attn = [e / denom for e in ex]          # exact divide: (C, 1) is tiny, tightens accuracy

    # ---- attention-weighted sum of branch features (lane-dense).
    fea_v = (feas_ref[0:C, :].astype(jnp.float32) * attn[0]
             + feas_ref[C:2 * C, :].astype(jnp.float32) * attn[1]
             + feas_ref[2 * C:3 * C, :].astype(jnp.float32) * attn[2])      # (C, L)
    out_ref[...] = fea_v.reshape(1, C, L)


def sknet_forward(x_nchw, params):
    """x_nchw: (N, C, H, W) float32  ->  (N, C, H, W) float32."""
    N, C, H, W = x_nchw.shape
    Hc, Wc = H + 2 * P7, W + 2 * P7
    Lc = Hc * Wc                                   # flat canvas length
    L = _round_up(Lc, LANE)                        # lane-dense padded flat length
    F = P7 * Wc + P7                               # largest |tap shift| on the flat axis
    Lext = _round_up(2 * F + L, LANE)              # whole number of lane groups
    d = params["wfc"].shape[0]

    # taps per full bf16 sublane tile, and padded kw-taps per kh row
    rep = SUBL_BF16 // C if (C <= SUBL_BF16 and SUBL_BF16 % C == 0) else 1
    kwp = _round_up(7, rep)                        # extra kw slots carry zero weights

    # zero-embed image into the padded canvas, flatten spatial, zero-extend by F
    xc = jnp.pad(x_nchw, ((0, 0), (0, 0), (P7, P7), (P7, P7)))
    xflat = xc.reshape(N, C, Lc)
    xe = jnp.pad(xflat, ((0, 0), (0, 0), (F, Lext - F - Lc))).astype(jnp.bfloat16)
    # replicate channels `rep` times with copy j pre-shifted by +j lanes so the
    # kernel's im2col is pure aligned full-tile loads/stores (no masked RMW stores).
    x4 = jnp.concatenate(
        [jnp.pad(xe[:, :, j:], ((0, 0), (0, 0), (0, j))) for j in range(rep)], axis=1)

    # 1.0 at valid canvas positions (global average pool)
    mask = jnp.pad(jnp.ones((H, W), jnp.float32), ((P7, P7), (P7, P7)))
    mask = jnp.pad(mask.reshape(1, Lc), ((0, 0), (0, L - Lc)))

    # fuse the 3 branch convs: zero-scatter each HWIO kernel into the 7 x kwp tap grid,
    # columns ordered (kh, kw, ci) to match the patch-buffer row order.
    blocks = []
    for i in range(M):
        K = 3 + 2 * i
        off = P7 - (1 + i)
        w_emb = jnp.zeros((7, kwp, C, C), jnp.float32)
        w_emb = w_emb.at[off:off + K, off:off + K].set(params[f"w{i}"])
        blocks.append(jnp.transpose(w_emb, (3, 0, 1, 2)).reshape(C, 7 * kwp * C))
    wall = jnp.concatenate(blocks, axis=0).astype(jnp.bfloat16)       # (3C, 7*kwp*C)

    scale = params["scale"].reshape(M * C, 1)
    bias = params["bias"].reshape(M * C, 1)

    # fold fc + fcs (no nonlinearity between them in this module -> folding is exact)
    wfcs2 = params["wfcs"].reshape(M * C, d)
    wfold = wfcs2 @ params["wfc"]                                      # (3C, C)
    bfold = (wfcs2 @ params["bfc"] + params["bfcs"].reshape(M * C)).reshape(M * C, 1)

    kernel = partial(sknet_kernel, C=C, Wc=Wc, F=F, L=L,
                     inv_hw=1.0 / (H * W), rep=rep, kwp=kwp)
    out_flat = pl.pallas_call(
        kernel,
        out_shape=jax.ShapeDtypeStruct((N, C, L), jnp.float32),
        grid_spec=pltpu.PrefetchScalarGridSpec(
            num_scalar_prefetch=0,
            # One batch element per step keeps grid >= 2 (v7x has 2 TensorCores).
            # NOTE: for larger N, pack NB elements along the lane axis per step to
            # amortize the per-step overhead (re-derive VMEM budget for v7x's 64 MiB
            # and raise vmem_limit_bytes on v5e/v6e if needed).
            grid=(N,),
            in_specs=[
                pl.BlockSpec((1, rep * C, Lext), lambda b: (b, 0, 0)),
                pl.BlockSpec((M * C, 7 * kwp * C), lambda b: (0, 0)),
                pl.BlockSpec((M * C, 1), lambda b: (0, 0)),
                pl.BlockSpec((M * C, 1), lambda b: (0, 0)),
                pl.BlockSpec((1, L), lambda b: (0, 0)),
                pl.BlockSpec((M * C, C), lambda b: (0, 0)),
                pl.BlockSpec((M * C, 1), lambda b: (0, 0)),
            ],
            out_specs=pl.BlockSpec((1, C, L), lambda b: (b, 0, 0)),
            scratch_shapes=[
                pltpu.VMEM((7 * kwp * C, L), jnp.bfloat16),   # shared im2col buffer
                pltpu.VMEM((M * C, L), jnp.bfloat16),         # branch features (bf16)
            ],
        ),
        compiler_params=pltpu.CompilerParams(dimension_semantics=("parallel",)),
    )(x4, wall, scale, bias, mask, wfold, bfold)

    # slice the valid H x W window back out of the flat canvas (cheap XLA ops)
    out = out_flat[:, :, :Lc].reshape(N, C, Hc, Wc)[:, :, P7:P7 + H, P7:P7 + W]
    return out


def make_params(key, C, d):
    """Deterministic synthetic parameters matching SKNet(features=C, M=3, r=2, L=32)."""
    keys = jax.random.split(key, 32)
    ki = iter(range(32))
    params = {}
    scales, biases = [], []
    for i in range(M):
        K = 3 + 2 * i
        fan_in = C * K * K
        w = jax.random.normal(keys[next(ki)], (K, K, C, C), jnp.float32) / jnp.sqrt(fan_in)
        b_conv = jax.random.normal(keys[next(ki)], (C,), jnp.float32) * 0.1
        gamma = 1.0 + 0.1 * jax.random.normal(keys[next(ki)], (C,), jnp.float32)
        beta = 0.1 * jax.random.normal(keys[next(ki)], (C,), jnp.float32)
        r_mean = 0.1 * jax.random.normal(keys[next(ki)], (C,), jnp.float32)
        r_var = 1.0 + 0.1 * jax.random.uniform(keys[next(ki)], (C,), jnp.float32)
        scale = gamma / jnp.sqrt(r_var + BN_EPS)            # folded BN scale
        bias = (b_conv - r_mean) * scale + beta             # folded BN bias (incl. conv bias)
        params[f"w{i}"] = w                                 # HWIO
        scales.append(scale)
        biases.append(bias)
    params["scale"] = jnp.stack(scales)[:, :, None]          # (M, C, 1)
    params["bias"] = jnp.stack(biases)[:, :, None]           # (M, C, 1)
    params["wfc"] = jax.random.normal(keys[next(ki)], (d, C), jnp.float32) / jnp.sqrt(C)
    params["bfc"] = 0.1 * jax.random.normal(keys[next(ki)], (d,), jnp.float32)
    wfcs, bfcs = [], []
    for i in range(M):
        wfcs.append(jax.random.normal(keys[next(ki)], (C, d), jnp.float32) / jnp.sqrt(d))
        bfcs.append(0.1 * jax.random.normal(keys[next(ki)], (C,), jnp.float32))
    params["wfcs"] = jnp.stack(wfcs)                          # (M, C, d)
    params["bfcs"] = jnp.stack(bfcs)                          # (M, C)
    return params


def sknet_reference(x_nchw, params):
    """Pure-JAX f32 reference (mirrors the PyTorch forward, un-fused) for validation."""
    x = jnp.transpose(x_nchw, (0, 2, 3, 1))  # NHWC
    feas = []
    for i in range(M):
        p = 1 + i
        y = jax.lax.conv_general_dilated(
            x, params[f"w{i}"], window_strides=(1, 1),
            padding=[(p, p), (p, p)],
            dimension_numbers=("NHWC", "HWIO", "NHWC"))
        y = y * params["scale"][i, :, 0] + params["bias"][i, :, 0]
        y = jnp.maximum(y, 0.0)
        feas.append(y)
    feas = jnp.stack(feas, axis=1)                 # (N, M, H, W, C)
    fea_U = feas.sum(axis=1)                       # (N, H, W, C)
    fea_s = fea_U.mean(axis=(1, 2))                # (N, C)
    fea_z = fea_s @ params["wfc"].T + params["bfc"]            # (N, d)
    vecs = jnp.stack([fea_z @ params["wfcs"][i].T + params["bfcs"][i]
                      for i in range(M)], axis=1)              # (N, M, C)
    attn = jax.nn.softmax(vecs, axis=1)
    fea_v = (feas * attn[:, :, None, None, :]).sum(axis=1)     # (N, H, W, C)
    return jnp.transpose(fea_v, (0, 3, 1, 2))


if __name__ == "__main__":
    N, C, H, W = 2, 4, 16, 16          # features=4, r=2, L=32 -> d = max(4//2, 32) = 32
    d = max(int(C / 2), 32)

    key = jax.random.PRNGKey(0)
    kx, kp = jax.random.split(key)
    x = jax.random.normal(kx, (N, C, H, W), jnp.float32)
    params = make_params(kp, C, d)

    out = jax.block_until_ready(sknet_forward(x, params))
    ref = jax.block_until_ready(sknet_reference(x, params))

    assert out.shape == (N, C, H, W)
    err = jnp.max(jnp.abs(out - ref))
    # bf16 conv operands / bf16 feature cache -> looser tolerance than pure f32
    tol = 3e-2 * jnp.maximum(1.0, jnp.max(jnp.abs(ref)))
    assert err < tol, f"Pallas kernel mismatch vs reference: max|err|={err}, tol={tol}"
    print("KERNEL_OK")
</pallas_src>

<mosaic_0001>
module attributes {stable_mosaic.version = 11 : i64} {
  func.func @sknet_kernel(%arg0: i32, %arg1: memref<1x16x768xbf16, #tpu.memory_space<vmem>>, %arg2: memref<12x224xbf16, #tpu.memory_space<vmem>>, %arg3: memref<12x1xf32, #tpu.memory_space<vmem>>, %arg4: memref<12x1xf32, #tpu.memory_space<vmem>>, %arg5: memref<1x512xf32, #tpu.memory_space<vmem>>, %arg6: memref<12x4xf32, #tpu.memory_space<vmem>>, %arg7: memref<12x1xf32, #tpu.memory_space<vmem>>, %arg8: memref<1x4x512xf32, #tpu.memory_space<vmem>>, %arg9: memref<224x512xbf16, #tpu.memory_space<vmem>>, %arg10: memref<12x512xbf16, #tpu.memory_space<vmem>>) attributes {dimension_semantics = [#tpu.dimension_semantics<parallel>], iteration_bounds = array<i64: 2>, scalar_prefetch = 0 : i64, scratch_operands = 2 : i64, tpu.core_type = #tpu.core_type<tc>, window_params = [{transform_indices = @transform_0, window_bounds = array<i64: 1, 16, 768>}, {pipeline_mode = #tpu.pipeline_mode<synchronous>, transform_indices = @transform_1, window_bounds = array<i64: 12, 224>}, {pipeline_mode = #tpu.pipeline_mode<synchronous>, transform_indices = @transform_2, window_bounds = array<i64: 12, 1>}, {pipeline_mode = #tpu.pipeline_mode<synchronous>, transform_indices = @transform_3, window_bounds = array<i64: 12, 1>}, {pipeline_mode = #tpu.pipeline_mode<synchronous>, transform_indices = @transform_4, window_bounds = array<i64: 1, 512>}, {pipeline_mode = #tpu.pipeline_mode<synchronous>, transform_indices = @transform_5, window_bounds = array<i64: 12, 4>}, {pipeline_mode = #tpu.pipeline_mode<synchronous>, transform_indices = @transform_6, window_bounds = array<i64: 12, 1>}, {transform_indices = @transform_7, window_bounds = array<i64: 1, 4, 512>}]} {
    %c0 = arith.constant 0 : index
    %c0_0 = arith.constant 0 : index
    %c0_1 = arith.constant 0 : index
    %0 = vector.load %arg1[%c0, %c0_0, %c0_1] : memref<1x16x768xbf16, #tpu.memory_space<vmem>>, vector<1x16x512xbf16>
    %1 = vector.shape_cast %0 : vector<1x16x512xbf16> to vector<16x512xbf16>
    %c0_2 = arith.constant 0 : index
    %c0_3 = arith.constant 0 : index
    %2 = vector.load %arg9[%c0_2, %c0_3] : memref<224x512xbf16, #tpu.memory_space<vmem>>, vector<16x512xbf16>
    tpu.vector_store %arg9[%c0_2, %c0_3], %1 {strides = array<i32>} : memref<224x512xbf16, #tpu.memory_space<vmem>>, vector<16x512xbf16>,
    %c0_4 = arith.constant 0 : index
    %c0_5 = arith.constant 0 : index
    %c4 = arith.constant 4 : index
    %3 = vector.load %arg1[%c0_4, %c0_5, %c4] : memref<1x16x768xbf16, #tpu.memory_space<vmem>>, vector<1x16x512xbf16>
    %4 = vector.shape_cast %3 : vector<1x16x512xbf16> to vector<16x512xbf16>
    %c16 = arith.constant 16 : index
    %c0_6 = arith.constant 0 : index
    %5 = vector.load %arg9[%c16, %c0_6] : memref<224x512xbf16, #tpu.memory_space<vmem>>, vector<16x512xbf16>
    tpu.vector_store %arg9[%c16, %c0_6], %4 {strides = array<i32>} : memref<224x512xbf16, #tpu.memory_space<vmem>>, vector<16x512xbf16>,
    %c0_7 = arith.constant 0 : index
    %c0_8 = arith.constant 0 : index
    %c22 = arith.constant 22 : index
    %6 = vector.load %arg1[%c0_7, %c0_8, %c22] : memref<1x16x768xbf16, #tpu.memory_space<vmem>>, vector<1x16x512xbf16>
    %7 = vector.shape_cast %6 : vector<1x16x512xbf16> to vector<16x512xbf16>
    %c32 = arith.constant 32 : index
    %c0_9 = arith.constant 0 : index
    %8 = vector.load %arg9[%c32, %c0_9] : memref<224x512xbf16, #tpu.memory_space<vmem>>, vector<16x512xbf16>
    tpu.vector_store %arg9[%c32, %c0_9], %7 {strides = array<i32>} : memref<224x512xbf16, #tpu.memory_space<vmem>>, vector<16x512xbf16>,
    %c0_10 = arith.constant 0 : index
    %c0_11 = arith.constant 0 : index
    %c26 = arith.constant 26 : index
    %9 = vector.load %arg1[%c0_10, %c0_11, %c26] : memref<1x16x768xbf16, #tpu.memory_space<vmem>>, vector<1x16x512xbf16>
    %10 = vector.shape_cast %9 : vector<1x16x512xbf16> to vector<16x512xbf16>
    %c48 = arith.constant 48 : index
    %c0_12 = arith.constant 0 : index
    %11 = vector.load %arg9[%c48, %c0_12] : memref<224x512xbf16, #tpu.memory_space<vmem>>, vector<16x512xbf16>
    tpu.vector_store %arg9[%c48, %c0_12], %10 {strides = array<i32>} : memref<224x512xbf16, #tpu.memory_space<vmem>>, vector<16x512xbf16>,
    %c0_13 = arith.constant 0 : index
    %c0_14 = arith.constant 0 : index
    %c44 = arith.constant 44 : index
    %12 = vector.load %arg1[%c0_13, %c0_14, %c44] : memref<1x16x768xbf16, #tpu.memory_space<vmem>>, vector<1x16x512xbf16>
    %13 = vector.shape_cast %12 : vector<1x16x512xbf16> to vector<16x512xbf16>
    %c64 = arith.constant 64 : index
    %c0_15 = arith.constant 0 : index
    %14 = vector.load %arg9[%c64, %c0_15] : memref<224x512xbf16, #tpu.memory_space<vmem>>, vector<16x512xbf16>
    tpu.vector_store %arg9[%c64, %c0_15], %13 {strides = array<i32>} : memref<224x512xbf16, #tpu.memory_space<vmem>>, vector<16x512xbf16>,
    %c0_16 = arith.constant 0 : index
    %c0_17 = arith.constant 0 : index
    %c48_18 = arith.constant 48 : index
    %15 = vector.load %arg1[%c0_16, %c0_17, %c48_18] : memref<1x16x768xbf16, #tpu.memory_space<vmem>>, vector<1x16x512xbf16>
    %16 = vector.shape_cast %15 : vector<1x16x512xbf16> to vector<16x512xbf16>
    %c80 = arith.constant 80 : index
    %c0_19 = arith.constant 0 : index
    %17 = vector.load %arg9[%c80, %c0_19] : memref<224x512xbf16, #tpu.memory_space<vmem>>, vector<16x512xbf16>
    tpu.vector_store %arg9[%c80, %c0_19], %16 {strides = array<i32>} : memref<224x512xbf16, #tpu.memory_space<vmem>>, vector<16x512xbf16>,
    %c0_20 = arith.constant 0 : index
    %c0_21 = arith.constant 0 : index
    %c66 = arith.constant 66 : index
    %18 = vector.load %arg1[%c0_20, %c0_21, %c66] : memref<1x16x768xbf16, #tpu.memory_space<vmem>>, vector<1x16x512xbf16>
    %19 = vector.shape_cast %18 : vector<1x16x512xbf16> to vector<16x512xbf16>
    %c96 = arith.constant 96 : index
    %c0_22 = arith.constant 0 : index
    %20 = vector.load %arg9[%c96, %c0_22] : memref<224x512xbf16, #tpu.memory_space<vmem>>, vector<16x512xbf16>
    tpu.vector_store %arg9[%c96, %c0_22], %19 {strides = array<i32>} : memref<224x512xbf16, #tpu.memory_space<vmem>>, vector<16x512xbf16>,
    %c0_23 = arith.constant 0 : index
    %c0_24 = arith.constant 0 : index
    %c70 = arith.constant 70 : index
    %21 = vector.load %arg1[%c0_23, %c0_24, %c70] : memref<1x16x768xbf16, #tpu.memory_space<vmem>>, vector<1x16x512xbf16>
    %22 = vector.shape_cast %21 : vector<1x16x512xbf16> to vector<16x512xbf16>
    %c112 = arith.constant 112 : index
    %c0_25 = arith.constant 0 : index
    %23 = vector.load %arg9[%c112, %c0_25] : memref<224x512xbf16, #tpu.memory_space<vmem>>, vector<16x512xbf16>
    tpu.vector_store %arg9[%c112, %c0_25], %22 {strides = array<i32>} : memref<224x512xbf16, #tpu.memory_space<vmem>>, vector<16x512xbf16>,
    %c0_26 = arith.constant 0 : index
    %c0_27 = arith.constant 0 : index
    %c88 = arith.constant 88 : index
    %24 = vector.load %arg1[%c0_26, %c0_27, %c88] : memref<1x16x768xbf16, #tpu.memory_space<vmem>>, vector<1x16x512xbf16>
    %25 = vector.shape_cast %24 : vector<1x16x512xbf16> to vector<16x512xbf16>
    %c128 = arith.constant 128 : index
    %c0_28 = arith.constant 0 : index
    %26 = vector.load %arg9[%c128, %c0_28] : memref<224x512xbf16, #tpu.memory_space<vmem>>, vector<16x512xbf16>
    tpu.vector_store %arg9[%c128, %c0_28], %25 {strides = array<i32>} : memref<224x512xbf16, #tpu.memory_space<vmem>>, vector<16x512xbf16>,
    %c0_29 = arith.constant 0 : index
    %c0_30 = arith.constant 0 : index
    %c92 = arith.constant 92 : index
    %27 = vector.load %arg1[%c0_29, %c0_30, %c92] : memref<1x16x768xbf16, #tpu.memory_space<vmem>>, vector<1x16x512xbf16>
    %28 = vector.shape_cast %27 : vector<1x16x512xbf16> to vector<16x512xbf16>
    %c144 = arith.constant 144 : index
    %c0_31 = arith.constant 0 : index
    %29 = vector.load %arg9[%c144, %c0_31] : memref<224x512xbf16, #tpu.memory_space<vmem>>, vector<16x512xbf16>
    tpu.vector_store %arg9[%c144, %c0_31], %28 {strides = array<i32>} : memref<224x512xbf16, #tpu.memory_space<vmem>>, vector<16x512xbf16>,
    %c0_32 = arith.constant 0 : index
    %c0_33 = arith.constant 0 : index
    %c110 = arith.constant 110 : index
    %30 = vector.load %arg1[%c0_32, %c0_33, %c110] : memref<1x16x768xbf16, #tpu.memory_space<vmem>>, vector<1x16x512xbf16>
    %31 = vector.shape_cast %30 : vector<1x16x512xbf16> to vector<16x512xbf16>
    %c160 = arith.constant 160 : index
    %c0_34 = arith.constant 0 : index
    %32 = vector.load %arg9[%c160, %c0_34] : memref<224x512xbf16, #tpu.memory_space<vmem>>, vector<16x512xbf16>
    tpu.vector_store %arg9[%c160, %c0_34], %31 {strides = array<i32>} : memref<224x512xbf16, #tpu.memory_space<vmem>>, vector<16x512xbf16>,
    %c0_35 = arith.constant 0 : index
    %c0_36 = arith.constant 0 : index
    %c114 = arith.constant 114 : index
    %33 = vector.load %arg1[%c0_35, %c0_36, %c114] : memref<1x16x768xbf16, #tpu.memory_space<vmem>>, vector<1x16x512xbf16>
    %34 = vector.shape_cast %33 : vector<1x16x512xbf16> to vector<16x512xbf16>
    %c176 = arith.constant 176 : index
    %c0_37 = arith.constant 0 : index
    %35 = vector.load %arg9[%c176, %c0_37] : memref<224x512xbf16, #tpu.memory_space<vmem>>, vector<16x512xbf16>
    tpu.vector_store %arg9[%c176, %c0_37], %34 {strides = array<i32>} : memref<224x512xbf16, #tpu.memory_space<vmem>>, vector<16x512xbf16>,
    %c0_38 = arith.constant 0 : index
    %c0_39 = arith.constant 0 : index
    %c132 = arith.constant 132 : index
    %36 = vector.load %arg1[%c0_38, %c0_39, %c132] : memref<1x16x768xbf16, #tpu.memory_space<vmem>>, vector<1x16x512xbf16>
    %37 = vector.shape_cast %36 : vector<1x16x512xbf16> to vector<16x512xbf16>
    %c192 = arith.constant 192 : index
    %c0_40 = arith.constant 0 : index
    %38 = vector.load %arg9[%c192, %c0_40] : memref<224x512xbf16, #tpu.memory_space<vmem>>, vector<16x512xbf16>
    tpu.vector_store %arg9[%c192, %c0_40], %37 {strides = array<i32>} : memref<224x512xbf16, #tpu.memory_space<vmem>>, vector<16x512xbf16>,
    %c0_41 = arith.constant 0 : index
    %c0_42 = arith.constant 0 : index
    %c136 = arith.constant 136 : index
    %39 = vector.load %arg1[%c0_41, %c0_42, %c136] : memref<1x16x768xbf16, #tpu.memory_space<vmem>>, vector<1x16x512xbf16>
    %40 = vector.shape_cast %39 : vector<1x16x512xbf16> to vector<16x512xbf16>
    %c208 = arith.constant 208 : index
    %c0_43 = arith.constant 0 : index
    %41 = vector.load %arg9[%c208, %c0_43] : memref<224x512xbf16, #tpu.memory_space<vmem>>, vector<16x512xbf16>
    tpu.vector_store %arg9[%c208, %c0_43], %40 {strides = array<i32>} : memref<224x512xbf16, #tpu.memory_space<vmem>>, vector<16x512xbf16>,
    %c0_44 = arith.constant 0 : index
    %c0_45 = arith.constant 0 : index
    %42 = vector.load %arg2[%c0_44, %c0_45] : memref<12x224xbf16, #tpu.memory_space<vmem>>, vector<12x224xbf16>
    %c0_46 = arith.constant 0 : index
    %c0_47 = arith.constant 0 : index
    %43 = vector.load %arg9[%c0_46, %c0_47] : memref<224x512xbf16, #tpu.memory_space<vmem>>, vector<224x512xbf16>
    %cst = arith.constant dense<0.000000e+00> : vector<12x512xf32>
    %44 = tpu.matmul %42, %43, %cst {dimension_numbers = #tpu.dot_dimension_numbers<[1], [0], [0], [1], [0, 0, 1, 1], [], []>} : vector<12x224xbf16>, vector<224x512xbf16>, vector<12x512xf32> -> vector<12x512xf32>
    %c0_48 = arith.constant 0 : index
    %c0_49 = arith.constant 0 : index
    %45 = vector.load %arg3[%c0_48, %c0_49] : memref<12x1xf32, #tpu.memory_space<vmem>>, vector<12x1xf32>
    %46 = vector.broadcast %45 : vector<12x1xf32> to vector<12x512xf32>
    %47 = arith.mulf %44, %46 : vector<12x512xf32>
    %c0_50 = arith.constant 0 : index
    %c0_51 = arith.constant 0 : index
    %48 = vector.load %arg4[%c0_50, %c0_51] : memref<12x1xf32, #tpu.memory_space<vmem>>, vector<12x1xf32>
    %49 = vector.broadcast %48 : vector<12x1xf32> to vector<12x512xf32>
    %50 = arith.addf %47, %49 : vector<12x512xf32>
    %cst_52 = arith.constant 0.000000e+00 : f32
    %51 = vector.broadcast %cst_52 : f32 to vector<12x512xf32>
    %52 = arith.maximumf %50, %51 : vector<12x512xf32>
    %53 = arith.truncf %52 : vector<12x512xf32> to vector<12x512xbf16>
    %c0_53 = arith.constant 0 : index
    %c0_54 = arith.constant 0 : index
    %54 = vector.load %arg10[%c0_53, %c0_54] : memref<12x512xbf16, #tpu.memory_space<vmem>>, vector<12x512xbf16>
    tpu.vector_store %arg10[%c0_53, %c0_54], %53 {strides = array<i32>} : memref<12x512xbf16, #tpu.memory_space<vmem>>, vector<12x512xbf16>,
    %55 = vector.extract_strided_slice %52 {offsets = [0, 0], sizes = [4, 512], strides = [1, 1]} : vector<12x512xf32> to vector<4x512xf32>
    %56 = vector.extract_strided_slice %52 {offsets = [4, 0], sizes = [4, 512], strides = [1, 1]} : vector<12x512xf32> to vector<4x512xf32>
    %57 = arith.addf %55, %56 : vector<4x512xf32>
    %58 = vector.extract_strided_slice %52 {offsets = [8, 0], sizes = [4, 512], strides = [1, 1]} : vector<12x512xf32> to vector<4x512xf32>
    %59 = arith.addf %57, %58 : vector<4x512xf32>
    %c0_55 = arith.constant 0 : index
    %c0_56 = arith.constant 0 : index
    %60 = vector.load %arg5[%c0_55, %c0_56] : memref<1x512xf32, #tpu.memory_space<vmem>>, vector<1x512xf32>
    %61 = vector.broadcast %60 : vector<1x512xf32> to vector<4x512xf32>
    %62 = arith.mulf %59, %61 : vector<4x512xf32>
    %cst_57 = arith.constant dense<0.000000e+00> : vector<4xf32>
    %63 = vector.multi_reduction <add>, %62, %cst_57 [1] : vector<4x512xf32> to vector<4xf32>
    %64 = vector.shape_cast %63 : vector<4xf32> to vector<4x1xf32>
    %cst_58 = arith.constant 3.906250e-03 : f32
    %65 = vector.broadcast %cst_58 : f32 to vector<4x1xf32>
    %66 = arith.mulf %64, %65 : vector<4x1xf32>
    %c0_59 = arith.constant 0 : index
    %c0_60 = arith.constant 0 : index
    %67 = vector.load %arg6[%c0_59, %c0_60] : memref<12x4xf32, #tpu.memory_space<vmem>>, vector<12x4xf32>
    %cst_61 = arith.constant dense<0.000000e+00> : vector<12x1xf32>
    %68 = tpu.matmul %67, %66, %cst_61 {dimension_numbers = #tpu.dot_dimension_numbers<[1], [0], [0], [1], [0, 0, 1, 1], [], []>} : vector<12x4xf32>, vector<4x1xf32>, vector<12x1xf32> -> vector<12x1xf32>
    %c0_62 = arith.constant 0 : index
    %c0_63 = arith.constant 0 : index
    %69 = vector.load %arg7[%c0_62, %c0_63] : memref<12x1xf32, #tpu.memory_space<vmem>>, vector<12x1xf32>
    %70 = arith.addf %68, %69 : vector<12x1xf32>
    %71 = vector.extract_strided_slice %70 {offsets = [0, 0], sizes = [4, 1], strides = [1, 1]} : vector<12x1xf32> to vector<4x1xf32>
    %72 = vector.extract_strided_slice %70 {offsets = [4, 0], sizes = [4, 1], strides = [1, 1]} : vector<12x1xf32> to vector<4x1xf32>
    %73 = vector.extract_strided_slice %70 {offsets = [8, 0], sizes = [4, 1], strides = [1, 1]} : vector<12x1xf32> to vector<4x1xf32>
    %74 = arith.maximumf %71, %72 : vector<4x1xf32>
    %75 = arith.maximumf %74, %73 : vector<4x1xf32>
    %76 = arith.subf %71, %75 : vector<4x1xf32>
    %77 = math.exp %76 : vector<4x1xf32>
    %78 = arith.subf %72, %75 : vector<4x1xf32>
    %79 = math.exp %78 : vector<4x1xf32>
    %80 = arith.subf %73, %75 : vector<4x1xf32>
    %81 = math.exp %80 : vector<4x1xf32>
    %82 = arith.addf %77, %79 : vector<4x1xf32>
    %83 = arith.addf %82, %81 : vector<4x1xf32>
    %84 = arith.divf %77, %83 : vector<4x1xf32>
    %85 = arith.divf %79, %83 : vector<4x1xf32>
    %86 = arith.divf %81, %83 : vector<4x1xf32>
    %c0_64 = arith.constant 0 : index
    %c0_65 = arith.constant 0 : index
    %87 = vector.load %arg10[%c0_64, %c0_65] : memref<12x512xbf16, #tpu.memory_space<vmem>>, vector<4x512xbf16>
    %88 = arith.extf %87 : vector<4x512xbf16> to vector<4x512xf32>
    %89 = vector.broadcast %84 : vector<4x1xf32> to vector<4x512xf32>
    %90 = arith.mulf %88, %89 : vector<4x512xf32>
    %c4_66 = arith.constant 4 : index
    %c0_67 = arith.constant 0 : index
    %91 = vector.load %arg10[%c4_66, %c0_67] : memref<12x512xbf16, #tpu.memory_space<vmem>>, vector<4x512xbf16>
    %92 = arith.extf %91 : vector<4x512xbf16> to vector<4x512xf32>
    %93 = vector.broadcast %85 : vector<4x1xf32> to vector<4x512xf32>
    %94 = arith.mulf %92, %93 : vector<4x512xf32>
    %95 = arith.addf %90, %94 : vector<4x512xf32>
    %c8 = arith.constant 8 : index
    %c0_68 = arith.constant 0 : index
    %96 = vector.load %arg10[%c8, %c0_68] : memref<12x512xbf16, #tpu.memory_space<vmem>>, vector<4x512xbf16>
    %97 = arith.extf %96 : vector<4x512xbf16> to vector<4x512xf32>
    %98 = vector.broadcast %86 : vector<4x1xf32> to vector<4x512xf32>
    %99 = arith.mulf %97, %98 : vector<4x512xf32>
    %100 = arith.addf %95, %99 : vector<4x512xf32>
    %101 = vector.shape_cast %100 : vector<4x512xf32> to vector<1x4x512xf32>
    %c0_69 = arith.constant 0 : index
    %c0_70 = arith.constant 0 : index
    %c0_71 = arith.constant 0 : index
    %102 = vector.load %arg8[%c0_69, %c0_70, %c0_71] : memref<1x4x512xf32, #tpu.memory_space<vmem>>, vector<1x4x512xf32>
    tpu.vector_store %arg8[%c0_69, %c0_70, %c0_71], %101 {strides = array<i32>} : memref<1x4x512xf32, #tpu.memory_space<vmem>>, vector<1x4x512xf32>,
    return
  }
  func.func @transform_0(%arg0: i32) -> (i32, i32, i32) {
    %c0_i32 = arith.constant 0 : i32
    %c0_i32_0 = arith.constant 0 : i32
    %c0_i32_1 = arith.constant 0 : i32
    return %arg0, %c0_i32, %c0_i32_0 : i32, i32, i32
  }
  func.func @transform_1(%arg0: i32) -> (i32, i32) {
    %c0_i32 = arith.constant 0 : i32
    %c0_i32_0 = arith.constant 0 : i32
    %c0_i32_1 = arith.constant 0 : i32
    return %c0_i32, %c0_i32_0 : i32, i32
  }
  func.func @transform_2(%arg0: i32) -> (i32, i32) {
    %c0_i32 = arith.constant 0 : i32
    %c0_i32_0 = arith.constant 0 : i32
    %c0_i32_1 = arith.constant 0 : i32
    return %c0_i32, %c0_i32_0 : i32, i32
  }
  func.func @transform_3(%arg0: i32) -> (i32, i32) {
    %c0_i32 = arith.constant 0 : i32
    %c0_i32_0 = arith.constant 0 : i32
    %c0_i32_1 = arith.constant 0 : i32
    return %c0_i32, %c0_i32_0 : i32, i32
  }
  func.func @transform_4(%arg0: i32) -> (i32, i32) {
    %c0_i32 = arith.constant 0 : i32
    %c0_i32_0 = arith.constant 0 : i32
    %c0_i32_1 = arith.constant 0 : i32
    return %c0_i32, %c0_i32_0 : i32, i32
  }
  func.func @transform_5(%arg0: i32) -> (i32, i32) {
    %c0_i32 = arith.constant 0 : i32
    %c0_i32_0 = arith.constant 0 : i32
    %c0_i32_1 = arith.constant 0 : i32
    return %c0_i32, %c0_i32_0 : i32, i32
  }
  func.func @transform_6(%arg0: i32) -> (i32, i32) {
    %c0_i32 = arith.constant 0 : i32
    %c0_i32_0 = arith.constant 0 : i32
    %c0_i32_1 = arith.constant 0 : i32
    return %c0_i32, %c0_i32_0 : i32, i32
  }
  func.func @transform_7(%arg0: i32) -> (i32, i32, i32) {
    %c0_i32 = arith.constant 0 : i32
    %c0_i32_0 = arith.constant 0 : i32
    %c0_i32_1 = arith.constant 0 : i32
    return %arg0, %c0_i32, %c0_i32_0 : i32, i32, i32
  }
}

</mosaic_0001>

<llo_original>
// kernel: tpu_custom_call.1
$region0: #{tpu_custom_call.1}
  #allocation0 [shape = 'u32[]', space=smem, size = 0x4, offset = 0x4, fixed_abs, tag = 'smem constant byte address 0x4 - core index']
  #allocation1 [shape = 'u32[72,128]{1,0:T(1,128)}', space=vmem, size = 0x9000, scoped, tag = 'internal scratch']
  #allocation2 [shape = 'bf16[224,512]{1,0:T(8,128)(2,1)}', space=vmem, size = 0x38000, scoped, tag = 'scratch operand']
  #allocation3 [shape = 'bf16[12,512]{1,0:T(8,128)(2,1)}', space=vmem, size = 0x4000, scoped, tag = 'scratch operand']
  %s0 = inlined_call_operand.hbm [shape: bf16[2,16,768], index: 0, kind: input, shape index: {}]
  %s1 = inlined_call_operand.vmem [shape: bf16[12,224], index: 1, kind: input, shape index: {}]
  %s2 = inlined_call_operand.vmem [shape: f32[12,1], index: 2, kind: input, shape index: {}]
  %s3 = inlined_call_operand.vmem [shape: f32[12,1], index: 3, kind: input, shape index: {}]
  %s4 = inlined_call_operand.vmem [shape: f32[1,512], index: 4, kind: input, shape index: {}]
  %s5 = inlined_call_operand.vmem [shape: f32[12,4], index: 5, kind: input, shape index: {}]
  %s6 = inlined_call_operand.vmem [shape: f32[12,1], index: 6, kind: input, shape index: {}]
  %s7 = inlined_call_operand.hbm [shape: f32[2,4,512], index: 7, kind: output, shape index: {}]
  %s8 = sld [smem:[#allocation0]]
  $region65: #{tpu_custom_call.1} parent=0
    _
  %s10 = ssub.s32 1, %s8
  %s11 = scalar_select 0, %s10, %s8
  $region1: #{tpu_custom_call.1} parent=0
    #allocation4 [shape = 'u8[49152]{0}', space=vmem, size = 0xc000, scoped, tag = 'input window, operand 0']
    #allocation5 [shape = 's32[2]{0}', space=sflag, size = 0x8, scoped, tag = 'scoped memory for tpu_custom_call.1']
    #allocation6 [shape = 's32[2]{0}', space=sflag, size = 0x8, scoped, tag = 'scoped memory for tpu_custom_call.1']
    #allocation7 [shape = 'u8[16384]{0}', space=vmem, size = 0x4000, scoped, tag = 'output window, operand 0']
    %12 = vsyncpa [#allocation5], 0
    %s13 = scalar_lea.sflag [#allocation5], 1
    %14 = vsyncpa %s13, 0
    %15 = vsyncpa [#allocation6], 0
    %s16 = scalar_lea.sflag [#allocation6], 1
    %17 = vsyncpa %s16, 0
    loop: start=0, step=1, limit=4
    $region2: #{tpu_custom_call.1} parent=1 // loop_pre_header
      _
    $region3: #{tpu_custom_call.1} parent=1 // loop_header
      %s19 = sphi 0, %s23
      %p20 = scmp.ge.s32.totalorder %s19, 4
      %s29 = sphi 0, %s31
      %s32 = sphi 0, %s29
      %s33 = sphi 0, %s32
      %s49 = sphi 0, %s33
      %s53 = sphi 0, %s53
      %s55 = sphi 0, %s53
      %s56 = sphi 0, %s55
      %s70 = sphi 0, %s56
      %s74 = sphi 0, %s74
      %s76 = sphi 0, %s74
      %s77 = sphi 0, %s76
      %s91 = sphi 0, %s77
      %s95 = sphi 0, %s95
      %s97 = sphi 0, %s95
      %s98 = sphi 0, %s97
      %s112 = sphi 0, %s98
      %s116 = sphi 0, %s116
      %s118 = sphi 0, %s116
      %s119 = sphi 0, %s118
      %s133 = sphi 0, %s119
      %s137 = sphi 0, %s137
      %s139 = sphi 0, %s137
      %s140 = sphi 0, %s139
      %s154 = sphi 0, %s140
      %s158 = sphi 0, %s158
      %s160 = sphi 0, %s158
      %s161 = sphi 0, %s160
      %s175 = sphi 0, %s161
      %s181 = sphi 0, %s183
      %s184 = sphi 0, %s181
      %s185 = sphi 0, %s184
      %s201 = sphi 0, %s185
    $region4: #{tpu_custom_call.1} parent=1 // loop_header_branch
      %22 = sbr.rel (%p20) target = $region8
    $region5: #{tpu_custom_call.1} parent=1 // loop_body
      %s24 = ssub.s32 %s19, 1
      %s25 = ssub.s32 %s19, 2
      %s26 = sadd.s32 %s19, 1
      %s27 = ssub.s32 %s19, %s26
      %p28 = scmp.eq.s32.totalorder %s27, 0
      %s30 = sadd.s32 %s29, 1
      %s31 = scalar_select %p28, %s29, %s30
      %p34 = pneg %p28
      %p35 = scmp.eq.s32.totalorder %s19, 1
      %p36 = por %p34, %p35
      %p37 = scmp.ne.s32.totalorder %s29, %s32
      %p38 = scmp.eq.s32.totalorder %s19, 0
      %p39 = por %p37, %p38
      %p40 = scmp.ne.s32.totalorder %s29, %s32
      %p41 = scmp.eq.s32.totalorder %s24, 1
      %p42 = por %p40, %p41
      %p43 = scmp.ne.s32.totalorder %s32, %s33
      %p44 = scmp.eq.s32.totalorder %s24, 0
      %p45 = por %p43, %p44
      %p46 = scmp.ne.s32.totalorder %s32, %s33
      %p47 = scmp.eq.s32.totalorder %s25, 1
      %p48 = por %p46, %p47
      %p50 = scmp.ne.s32.totalorder %s33, %s49
      %p51 = scmp.eq.s32.totalorder %s25, 0
      %p52 = por %p50, %p51
      %s54 = sadd.s32 %s53, 1
      %p57 = scmp.eq.s32.totalorder %s19, 1
      %p58 = scmp.ne.s32.totalorder %s53, %s55
      %p59 = scmp.eq.s32.totalorder %s19, 0
      %p60 = por %p58, %p59
      %p61 = scmp.ne.s32.totalorder %s53, %s55
      %p62 = scmp.eq.s32.totalorder %s24, 1
      %p63 = por %p61, %p62
      %p64 = scmp.ne.s32.totalorder %s55, %s56
      %p65 = scmp.eq.s32.totalorder %s24, 0
      %p66 = por %p64, %p65
      %p67 = scmp.ne.s32.totalorder %s55, %s56
      %p68 = scmp.eq.s32.totalorder %s25, 1
      %p69 = por %p67, %p68
      %p71 = scmp.ne.s32.totalorder %s56, %s70
      %p72 = scmp.eq.s32.totalorder %s25, 0
      %p73 = por %p71, %p72
      %s75 = sadd.s32 %s74, 1
      %p78 = scmp.eq.s32.totalorder %s19, 1
      %p79 = scmp.ne.s32.totalorder %s74, %s76
      %p80 = scmp.eq.s32.totalorder %s19, 0
      %p81 = por %p79, %p80
      %p82 = scmp.ne.s32.totalorder %s74, %s76
      %p83 = scmp.eq.s32.totalorder %s24, 1
      %p84 = por %p82, %p83
      %p85 = scmp.ne.s32.totalorder %s76, %s77
      %p86 = scmp.eq.s32.totalorder %s24, 0
      %p87 = por %p85, %p86
      %p88 = scmp.ne.s32.totalorder %s76, %s77
      %p89 = scmp.eq.s32.totalorder %s25, 1
      %p90 = por %p88, %p89
      %p92 = scmp.ne.s32.totalorder %s77, %s91
      %p93 = scmp.eq.s32.totalorder %s25, 0
      %p94 = por %p92, %p93
      %s96 = sadd.s32 %s95, 1
      %p99 = scmp.eq.s32.totalorder %s19, 1
      %p100 = scmp.ne.s32.totalorder %s95, %s97
      %p101 = scmp.eq.s32.totalorder %s19, 0
      %p102 = por %p100, %p101
      %p103 = scmp.ne.s32.totalorder %s95, %s97
      %p104 = scmp.eq.s32.totalorder %s24, 1
      %p105 = por %p103, %p104
      %p106 = scmp.ne.s32.totalorder %s97, %s98
      %p107 = scmp.eq.s32.totalorder %s24, 0
      %p108 = por %p106, %p107
      %p109 = scmp.ne.s32.totalorder %s97, %s98
      %p110 = scmp.eq.s32.totalorder %s25, 1
      %p111 = por %p109, %p110
      %p113 = scmp.ne.s32.totalorder %s98, %s112
      %p114 = scmp.eq.s32.totalorder %s25, 0
      %p115 = por %p113, %p114
      %s117 = sadd.s32 %s116, 1
      %p120 = scmp.eq.s32.totalorder %s19, 1
      %p121 = scmp.ne.s32.totalorder %s116, %s118
      %p122 = scmp.eq.s32.totalorder %s19, 0
      %p123 = por %p121, %p122
      %p124 = scmp.ne.s32.totalorder %s116, %s118
      %p125 = scmp.eq.s32.totalorder %s24, 1
      %p126 = por %p124, %p125
      %p127 = scmp.ne.s32.totalorder %s118, %s119
      %p128 = scmp.eq.s32.totalorder %s24, 0
      %p129 = por %p127, %p128
      %p130 = scmp.ne.s32.totalorder %s118, %s119
      %p131 = scmp.eq.s32.totalorder %s25, 1
      %p132 = por %p130, %p131
      %p134 = scmp.ne.s32.totalorder %s119, %s133
      %p135 = scmp.eq.s32.totalorder %s25, 0
      %p136 = por %p134, %p135
      %s138 = sadd.s32 %s137, 1
      %p141 = scmp.eq.s32.totalorder %s19, 1
      %p142 = scmp.ne.s32.totalorder %s137, %s139
      %p143 = scmp.eq.s32.totalorder %s19, 0
      %p144 = por %p142, %p143
      %p145 = scmp.ne.s32.totalorder %s137, %s139
      %p146 = scmp.eq.s32.totalorder %s24, 1
      %p147 = por %p145, %p146
      %p148 = scmp.ne.s32.totalorder %s139, %s140
      %p149 = scmp.eq.s32.totalorder %s24, 0
      %p150 = por %p148, %p149
      %p151 = scmp.ne.s32.totalorder %s139, %s140
      %p152 = scmp.eq.s32.totalorder %s25, 1
      %p153 = por %p151, %p152
      %p155 = scmp.ne.s32.totalorder %s140, %s154
      %p156 = scmp.eq.s32.totalorder %s25, 0
      %p157 = por %p155, %p156
      %s159 = sadd.s32 %s158, 1
      %p162 = scmp.eq.s32.totalorder %s19, 1
      %p163 = scmp.ne.s32.totalorder %s158, %s160
      %p164 = scmp.eq.s32.totalorder %s19, 0
      %p165 = por %p163, %p164
      %p166 = scmp.ne.s32.totalorder %s158, %s160
      %p167 = scmp.eq.s32.totalorder %s24, 1
      %p168 = por %p166, %p167
      %p169 = scmp.ne.s32.totalorder %s160, %s161
      %p170 = scmp.eq.s32.totalorder %s24, 0
      %p171 = por %p169, %p170
      %p172 = scmp.ne.s32.totalorder %s160, %s161
      %p173 = scmp.eq.s32.totalorder %s25, 1
      %p174 = por %p172, %p173
      %p176 = scmp.ne.s32.totalorder %s161, %s175
      %p177 = scmp.eq.s32.totalorder %s25, 0
      %p178 = por %p176, %p177
      %s179 = ssub.s32 %s19, %s26
      %p180 = scmp.eq.s32.totalorder %s179, 0
      %s182 = sadd.s32 %s181, 1
      %s183 = scalar_select %p180, %s181, %s182
      %p186 = pneg %p180
      %p187 = scmp.eq.s32.totalorder %s19, 1
      %p188 = por %p186, %p187
      %p189 = scmp.ne.s32.totalorder %s181, %s184
      %p190 = scmp.eq.s32.totalorder %s19, 0
      %p191 = por %p189, %p190
      %p192 = scmp.ne.s32.totalorder %s181, %s184
      %p193 = scmp.eq.s32.totalorder %s24, 1
      %p194 = por %p192, %p193
      %p195 = scmp.ne.s32.totalorder %s184, %s185
      %p196 = scmp.eq.s32.totalorder %s24, 0
      %p197 = por %p195, %p196
      %p198 = scmp.ne.s32.totalorder %s184, %s185
      %p199 = scmp.eq.s32.totalorder %s25, 1
      %p200 = por %p198, %p199
      %p202 = scmp.ne.s32.totalorder %s185, %s201
      %p203 = scmp.eq.s32.totalorder %s25, 0
      %p204 = por %p202, %p203
      %p205 = scmp.le.s32.totalorder 1, %s19
      %p206 = scmp.lt.s32.totalorder %s19, 3
      %p207 = pnand %p205, %p206
      %p208 = pneg %p207
      // Predicated region
      $region9: #{tpu_custom_call.1} parent=5 // pred_check
        _
      $region10: #{tpu_custom_call.1} parent=5 // pred_check_branch
        %210 = sbr.rel (%p207) target = $region12
      $region11: #{tpu_custom_call.1} parent=5 // pred_region
        %s211 = ssub.s32 %s19, 1
        // Predicated region
        $region13: #{tpu_custom_call.1} parent=11 // pred_check
          %p212 = pneg %p66
        $region14: #{tpu_custom_call.1} parent=11 // pred_check_branch
          %214 = sbr.rel (%p212) target = $region16
        $region15: #{tpu_custom_call.1} parent=11 // pred_region
          _
        $region16: #{tpu_custom_call.1} parent=11 // pred_fallthru
          _
        // Predicated region
        $region17: #{tpu_custom_call.1} parent=11 // pred_check
          %p215 = pneg %p87
        $region18: #{tpu_custom_call.1} parent=11 // pred_check_branch
          %217 = sbr.rel (%p215) target = $region20
        $region19: #{tpu_custom_call.1} parent=11 // pred_region
          _
        $region20: #{tpu_custom_call.1} parent=11 // pred_fallthru
          _
        // Predicated region
        $region21: #{tpu_custom_call.1} parent=11 // pred_check
          %p218 = pneg %p108
        $region22: #{tpu_custom_call.1} parent=11 // pred_check_branch
          %220 = sbr.rel (%p218) target = $region24
        $region23: #{tpu_custom_call.1} parent=11 // pred_region
          _
        $region24: #{tpu_custom_call.1} parent=11 // pred_fallthru
          _
        // Predicated region
        $region25: #{tpu_custom_call.1} parent=11 // pred_check
          %p221 = pneg %p129
        $region26: #{tpu_custom_call.1} parent=11 // pred_check_branch
          %223 = sbr.rel (%p221) target = $region28
        $region27: #{tpu_custom_call.1} parent=11 // pred_region
          _
        $region28: #{tpu_custom_call.1} parent=11 // pred_fallthru
          _
        // Predicated region
        $region29: #{tpu_custom_call.1} parent=11 // pred_check
          %p224 = pneg %p150
        $region30: #{tpu_custom_call.1} parent=11 // pred_check_branch
          %226 = sbr.rel (%p224) target = $region32
        $region31: #{tpu_custom_call.1} parent=11 // pred_region
          _
        $region32: #{tpu_custom_call.1} parent=11 // pred_fallthru
          _
        // Predicated region
        $region33: #{tpu_custom_call.1} parent=11 // pred_check
          %p227 = pneg %p171
        $region34: #{tpu_custom_call.1} parent=11 // pred_check_branch
          %229 = sbr.rel (%p227) target = $region36
        $region35: #{tpu_custom_call.1} parent=11 // pred_region
          _
        $region36: #{tpu_custom_call.1} parent=11 // pred_fallthru
          _
      $region12: #{tpu_custom_call.1} parent=5 // pred_fallthru
        _
      %p230 = scmp.lt.s32.totalorder %s19, 2
      // Predicated region
      $region37: #{tpu_custom_call.1} parent=5 // pred_check
        %p231 = pneg %p230
      $region38: #{tpu_custom_call.1} parent=5 // pred_check_branch
        %233 = sbr.rel (%p231) target = $region40
      $region39: #{tpu_custom_call.1} parent=5 // pred_region
        // Predicated region
        $region41: #{tpu_custom_call.1} parent=39 // pred_check
          %p234 = pneg %p39
        $region42: #{tpu_custom_call.1} parent=39 // pred_check_branch
          %236 = sbr.rel (%p234) target = $region44
        $region43: #{tpu_custom_call.1} parent=39 // pred_region
          %s237 = sand.u32 %s29, 1
          %s238 = scalar_lea.sflag [#allocation5], %s237
          %s239 = sand.u32 %s29, 1
          %s240 = smul.addr %s239, 48
          %s241 = scalar_lea.vmem [#allocation4], %s240
          %243 = vsyncadd %s238, 0
          %s244 = smul.addr %s19, 12
          %s245 = smul.addr %s244, 4
          %s246 = scalar_lea.hbm %s0, %s245
          %s247 = sshll.u32 %s246, 4
          %s248 = int_to_ptr.hbm [resolvable:$true] %s247
          %s249 = sshll.u32 %s241, 4
          %s250 = int_to_ptr.vmem [resolvable:$true] %s249
          %255 = dma.hbm_to_vmem [thread:$0]  %s248, 768, %s250, %s238, 384, 384, 24
        $region44: #{tpu_custom_call.1} parent=39 // pred_fallthru
          _
      $region40: #{tpu_custom_call.1} parent=5 // pred_fallthru
        _
      %p256 = scmp.le.s32.totalorder 1, %s19
      %p257 = scmp.lt.s32.totalorder %s19, 3
      %p258 = pnand %p256, %p257
      %p259 = pneg %p258
      // Predicated region
      $region45: #{tpu_custom_call.1} parent=5 // pred_check
        _
      $region46: #{tpu_custom_call.1} parent=5 // pred_check_branch
        %261 = sbr.rel (%p258) target = $region48
      $region47: #{tpu_custom_call.1} parent=5 // pred_region
        %s262 = ssub.s32 %s19, 1
        %s263 = sand.u32 %s32, 1
        %s264 = scalar_lea.sflag [#allocation5], %s263
        %s265 = sand.u32 %s32, 1
        %s266 = smul.addr %s265, 48
        %s267 = scalar_lea.vmem [#allocation4], %s266
        // Predicated region
        $region49: #{tpu_custom_call.1} parent=47 // pred_check
          %p268 = pneg %p45
        $region50: #{tpu_custom_call.1} parent=47 // pred_check_branch
          %270 = sbr.rel (%p268) target = $region52
        $region51: #{tpu_custom_call.1} parent=47 // pred_region
          %272 = dma.done %s264, 768
        $region52: #{tpu_custom_call.1} parent=47 // pred_fallthru
          _
        %s273 = sand.u32 %s32, 1
        %s274 = scalar_lea.sflag [#allocation5], %s273
        %s275 = sand.u32 %s32, 1
        %s276 = smul.addr %s275, 48
        %s277 = scalar_lea.vmem [#allocation4], %s276
        %p278 = pneg %p45
        %p279 = pneg %p42
        %p280 = pneg %p66
        %p281 = pneg %p63
        %p282 = pneg %p87
        %p283 = pneg %p84
        %p284 = pneg %p108
        %p285 = pneg %p105
        %p286 = pneg %p129
        %p287 = pneg %p126
        %p288 = pneg %p150
        %p289 = pneg %p147
        %p290 = pneg %p171
        %p291 = pneg %p168
        %p292 = pneg %p197
        %p293 = pneg %p194
        %s294 = sand.u32 %s184, 1
        %s295 = scalar_lea.sflag [#allocation6], %s294
        %s296 = sand.u32 %s184, 1
        %s297 = smul.addr %s296, 16
        %s298 = scalar_lea.vmem [#allocation7], %s297
        %v300 = vld [vmem:[%s267] sm:$0xff]
        %v301 = vld [vmem:[%s267 + $0x8] sm:$0xff]
        %v302 = vld [vmem:[%s267 + $0x18] sm:$0xff]
        %v303 = vld [vmem:[%s267 + $0x20] sm:$0xff]
        %304 = vst [vmem:[#allocation2] sm:$0xff] %v300
        %305 = vst [vmem:[#allocation2 + $0x8] sm:$0xff] %v301
        %306 = vst [vmem:[#allocation2 + $0x10] sm:$0xff] %v302
        %307 = vst [vmem:[#allocation2 + $0x18] sm:$0xff] %v303
        %v308 = vld [vmem:[%s267] sm:$0xff]
        %v309 = vld [vmem:[%s267 + $0x8] sm:$0xff]
        %v310 = vld [vmem:[%s267 + $0x10] sm:$0xf]
        %v311 = vld [vmem:[%s267 + $0x18] sm:$0xff]
        %v312 = vld [vmem:[%s267 + $0x20] sm:$0xff]
        %v313 = vld [vmem:[%s267 + $0x28] sm:$0xf]
        %320 = vrot.lane.b32.xlu0 %v308, 124
        %v321 = vpop.permute.xlu0 %320
        %322 = vrot.lane.b32.xlu0 %v309, 124
        %v323 = vpop.permute.xlu0 %322
        %324 = vrot.lane.b32.xlu0 %v310, 124
        %v325 = vpop.permute.xlu0 %324
        %326 = vrot.lane.b32.xlu0 %v311, 124
        %v327 = vpop.permute.xlu0 %326
        %328 = vrot.lane.b32.xlu0 %v312, 124
        %v329 = vpop.permute.xlu0 %328
        %330 = vrot.lane.b32.xlu0 %v313, 124
        %v331 = vpop.permute.xlu0 %330
        %v332 = vrot.slane %v321, 4
        %v333 = vrot.slane %v323, 4
        %v334 = vrot.slane %v325, 4
        %v335 = vrot.slane %v327, 4
        %v336 = vrot.slane %v329, 4
        %v337 = vrot.slane %v331, 4
        %vm338 = vcmask 1043456
        %v339 = vsel %vm338, %v332, %v333
        %vm340 = vcmask 1014784
        %v341 = vsel %vm340, %v321, %v339
        %v342 = vsel %vm338, %v333, %v334
        %v343 = vsel %vm340, %v323, %v342
        %v344 = vsel %vm338, %v335, %v336
        %v345 = vsel %vm340, %v327, %v344
        %v346 = vsel %vm338, %v336, %v337
        %v347 = vsel %vm340, %v329, %v346
        %352 = vst [vmem:[#allocation2 + $0x20] sm:$0xff] %v341
        %353 = vst [vmem:[#allocation2 + $0x28] sm:$0xff] %v343
        %354 = vst [vmem:[#allocation2 + $0x30] sm:$0xff] %v345
        %355 = vst [vmem:[#allocation2 + $0x38] sm:$0xff] %v347
        %v356 = vld [vmem:[%s267] sm:$0xff]
        %v357 = vld [vmem:[%s267 + $0x8] sm:$0xff]
        %v358 = vld [vmem:[%s267 + $0x10] sm:$0xf]
        %v359 = vld [vmem:[%s267 + $0x18] sm:$0xff]
        %v360 = vld [vmem:[%s267 + $0x20] sm:$0xff]
        %v361 = vld [vmem:[%s267 + $0x28] sm:$0xf]
        %368 = vrot.lane.b32.xlu0 %v356, 106
        %v369 = vpop.permute.xlu0 %368
        %370 = vrot.lane.b32.xlu0 %v357, 106
        %v371 = vpop.permute.xlu0 %370
        %372 = vrot.lane.b32.xlu0 %v358, 106
        %v373 = vpop.permute.xlu0 %372
        %374 = vrot.lane.b32.xlu0 %v359, 106
        %v375 = vpop.permute.xlu0 %374
        %376 = vrot.lane.b32.xlu0 %v360, 106
        %v377 = vpop.permute.xlu0 %376
        %378 = vrot.lane.b32.xlu0 %v361, 106
        %v379 = vpop.permute.xlu0 %378
        %v380 = vrot.slane %v369, 4
        %v381 = vrot.slane %v371, 4
        %v382 = vrot.slane %v373, 4
        %v383 = vrot.slane %v375, 4
        %v384 = vrot.slane %v377, 4
        %v385 = vrot.slane %v379, 4
        %v386 = vsel %vm338, %v380, %v381
        %vm387 = vcmask 867328
        %v388 = vsel %vm387, %v369, %v386
        %v389 = vsel %vm338, %v381, %v382
        %v390 = vsel %vm387, %v371, %v389
        %v391 = vsel %vm338, %v383, %v384
        %v392 = vsel %vm387, %v375, %v391
        %v393 = vsel %vm338, %v384, %v385
        %v394 = vsel %vm387, %v377, %v393
        %399 = vst [vmem:[#allocation2 + $0x40] sm:$0xff] %v388
        %400 = vst [vmem:[#allocation2 + $0x48] sm:$0xff] %v390
        %401 = vst [vmem:[#allocation2 + $0x50] sm:$0xff] %v392
        %402 = vst [vmem:[#allocation2 + $0x58] sm:$0xff] %v394
        %v403 = vld [vmem:[%s267] sm:$0xff]
        %v404 = vld [vmem:[%s267 + $0x8] sm:$0xff]
        %v405 = vld [vmem:[%s267 + $0x10] sm:$0xf]
        %v406 = vld [vmem:[%s267 + $0x18] sm:$0xff]
        %v407 = vld [vmem:[%s267 + $0x20] sm:$0xff]
        %v408 = vld [vmem:[%s267 + $0x28] sm:$0xf]
        %415 = vrot.lane.b32.xlu0 %v403, 102
        %v416 = vpop.permute.xlu0 %415
        %417 = vrot.lane.b32.xlu0 %v404, 102
        %v418 = vpop.permute.xlu0 %417
        %419 = vrot.lane.b32.xlu0 %v405, 102
        %v420 = vpop.permute.xlu0 %419
        %421 = vrot.lane.b32.xlu0 %v406, 102
        %v422 = vpop.permute.xlu0 %421
        %423 = vrot.lane.b32.xlu0 %v407, 102
        %v424 = vpop.permute.xlu0 %423
        %425 = vrot.lane.b32.xlu0 %v408, 102
        %v426 = vpop.permute.xlu0 %425
        %v427 = vrot.slane %v416, 4
        %v428 = vrot.slane %v418, 4
        %v429 = vrot.slane %v420, 4
        %v430 = vrot.slane %v422, 4
        %v431 = vrot.slane %v424, 4
        %v432 = vrot.slane %v426, 4
        %v433 = vsel %vm338, %v427, %v428
        %vm434 = vcmask 834560
        %v435 = vsel %vm434, %v416, %v433
        %v436 = vsel %vm338, %v428, %v429
        %v437 = vsel %vm434, %v418, %v436
        %v438 = vsel %vm338, %v430, %v431
        %v439 = vsel %vm434, %v422, %v438
        %v440 = vsel %vm338, %v431, %v432
        %v441 = vsel %vm434, %v424, %v440
        %446 = vst [vmem:[#allocation2 + $0x60] sm:$0xff] %v435
        %447 = vst [vmem:[#allocation2 + $0x68] sm:$0xff] %v437
        %448 = vst [vmem:[#allocation2 + $0x70] sm:$0xff] %v439
        %449 = vst [vmem:[#allocation2 + $0x78] sm:$0xff] %v441
        %v450 = vld [vmem:[%s267] sm:$0xff]
        %v451 = vld [vmem:[%s267 + $0x8] sm:$0xff]
        %v452 = vld [vmem:[%s267 + $0x10] sm:$0xf]
        %v453 = vld [vmem:[%s267 + $0x18] sm:$0xff]
        %v454 = vld [vmem:[%s267 + $0x20] sm:$0xff]
        %v455 = vld [vmem:[%s267 + $0x28] sm:$0xf]
        %462 = vrot.lane.b32.xlu0 %v450, 84
        %v463 = vpop.permute.xlu0 %462
        %464 = vrot.lane.b32.xlu0 %v451, 84
        %v465 = vpop.permute.xlu0 %464
        %466 = vrot.lane.b32.xlu0 %v452, 84
        %v467 = vpop.permute.xlu0 %466
        %468 = vrot.lane.b32.xlu0 %v453, 84
        %v469 = vpop.permute.xlu0 %468
        %470 = vrot.lane.b32.xlu0 %v454, 84
        %v471 = vpop.permute.xlu0 %470
        %472 = vrot.lane.b32.xlu0 %v455, 84
        %v473 = vpop.permute.xlu0 %472
        %v474 = vrot.slane %v463, 4
        %v475 = vrot.slane %v465, 4
        %v476 = vrot.slane %v467, 4
        %v477 = vrot.slane %v469, 4
        %v478 = vrot.slane %v471, 4
        %v479 = vrot.slane %v473, 4
        %v480 = vsel %vm338, %v474, %v475
        %vm481 = vcmask 687104
        %v482 = vsel %vm481, %v463, %v480
        %v483 = vsel %vm338, %v475, %v476
        %v484 = vsel %vm481, %v465, %v483
        %v485 = vsel %vm338, %v477, %v478
        %v486 = vsel %vm481, %v469, %v485
        %v487 = vsel %vm338, %v478, %v479
        %v488 = vsel %vm481, %v471, %v487
        %493 = vst [vmem:[#allocation2 + $0x80] sm:$0xff] %v482
        %494 = vst [vmem:[#allocation2 + $0x88] sm:$0xff] %v484
        %495 = vst [vmem:[#allocation2 + $0x90] sm:$0xff] %v486
        %496 = vst [vmem:[#allocation2 + $0x98] sm:$0xff] %v488
        %v497 = vld [vmem:[%s267] sm:$0xff]
        %v498 = vld [vmem:[%s267 + $0x8] sm:$0xff]
        %v499 = vld [vmem:[%s267 + $0x10] sm:$0xf]
        %v500 = vld [vmem:[%s267 + $0x18] sm:$0xff]
        %v501 = vld [vmem:[%s267 + $0x20] sm:$0xff]
        %v502 = vld [vmem:[%s267 + $0x28] sm:$0xf]
        %509 = vrot.lane.b32.xlu0 %v497, 80
        %v510 = vpop.permute.xlu0 %509
        %511 = vrot.lane.b32.xlu0 %v498, 80
        %v512 = vpop.permute.xlu0 %511
        %513 = vrot.lane.b32.xlu0 %v499, 80
        %v514 = vpop.permute.xlu0 %513
        %515 = vrot.lane.b32.xlu0 %v500, 80
        %v516 = vpop.permute.xlu0 %515
        %517 = vrot.lane.b32.xlu0 %v501, 80
        %v518 = vpop.permute.xlu0 %517
        %519 = vrot.lane.b32.xlu0 %v502, 80
        %v520 = vpop.permute.xlu0 %519
        %v521 = vrot.slane %v510, 4
        %v522 = vrot.slane %v512, 4
        %v523 = vrot.slane %v514, 4
        %v524 = vrot.slane %v516, 4
        %v525 = vrot.slane %v518, 4
        %v526 = vrot.slane %v520, 4
        %v527 = vsel %vm338, %v521, %v522
        %vm528 = vcmask 654336
        %v529 = vsel %vm528, %v510, %v527
        %v530 = vsel %vm338, %v522, %v523
        %v531 = vsel %vm528, %v512, %v530
        %v532 = vsel %vm338, %v524, %v525
        %v533 = vsel %vm528, %v516, %v532
        %v534 = vsel %vm338, %v525, %v526
        %v535 = vsel %vm528, %v518, %v534
        %540 = vst [vmem:[#allocation2 + $0xa0] sm:$0xff] %v529
        %541 = vst [vmem:[#allocation2 + $0xa8] sm:$0xff] %v531
        %542 = vst [vmem:[#allocation2 + $0xb0] sm:$0xff] %v533
        %543 = vst [vmem:[#allocation2 + $0xb8] sm:$0xff] %v535
        %v544 = vld [vmem:[%s267] sm:$0xff]
        %v545 = vld [vmem:[%s267 + $0x8] sm:$0xff]
        %v546 = vld [vmem:[%s267 + $0x10] sm:$0xf]
        %v547 = vld [vmem:[%s267 + $0x18] sm:$0xff]
        %v548 = vld [vmem:[%s267 + $0x20] sm:$0xff]
        %v549 = vld [vmem:[%s267 + $0x28] sm:$0xf]
        %556 = vrot.lane.b32.xlu0 %v544, 62
        %v557 = vpop.permute.xlu0 %556
        %558 = vrot.lane.b32.xlu0 %v545, 62
        %v559 = vpop.permute.xlu0 %558
        %560 = vrot.lane.b32.xlu0 %v546, 62
        %v561 = vpop.permute.xlu0 %560
        %562 = vrot.lane.b32.xlu0 %v547, 62
        %v563 = vpop.permute.xlu0 %562
        %564 = vrot.lane.b32.xlu0 %v548, 62
        %v565 = vpop.permute.xlu0 %564
        %566 = vrot.lane.b32.xlu0 %v549, 62
        %v567 = vpop.permute.xlu0 %566
        %v568 = vrot.slane %v557, 4
        %v569 = vrot.slane %v559, 4
        %v570 = vrot.slane %v561, 4
        %v571 = vrot.slane %v563, 4
        %v572 = vrot.slane %v565, 4
        %v573 = vrot.slane %v567, 4
        %v574 = vsel %vm338, %v568, %v569
        %vm575 = vcmask 506880
        %v576 = vsel %vm575, %v557, %v574
        %v577 = vsel %vm338, %v569, %v570
        %v578 = vsel %vm575, %v559, %v577
        %v579 = vsel %vm338, %v571, %v572
        %v580 = vsel %vm575, %v563, %v579
        %v581 = vsel %vm338, %v572, %v573
        %v582 = vsel %vm575, %v565, %v581
        %587 = vst [vmem:[#allocation2 + $0xc0] sm:$0xff] %v576
        %588 = vst [vmem:[#allocation2 + $0xc8] sm:$0xff] %v578
        %589 = vst [vmem:[#allocation2 + $0xd0] sm:$0xff] %v580
        %590 = vst [vmem:[#allocation2 + $0xd8] sm:$0xff] %v582
        %v591 = vld [vmem:[%s267] sm:$0xff]
        %v592 = vld [vmem:[%s267 + $0x8] sm:$0xff]
        %v593 = vld [vmem:[%s267 + $0x10] sm:$0xf]
        %v594 = vld [vmem:[%s267 + $0x18] sm:$0xff]
        %v595 = vld [vmem:[%s267 + $0x20] sm:$0xff]
        %v596 = vld [vmem:[%s267 + $0x28] sm:$0xf]
        %603 = vrot.lane.b32.xlu0 %v591, 58
        %v604 = vpop.permute.xlu0 %603
        %605 = vrot.lane.b32.xlu0 %v592, 58
        %v606 = vpop.permute.xlu0 %605
        %607 = vrot.lane.b32.xlu0 %v593, 58
        %v608 = vpop.permute.xlu0 %607
        %609 = vrot.lane.b32.xlu0 %v594, 58
        %v610 = vpop.permute.xlu0 %609
        %611 = vrot.lane.b32.xlu0 %v595, 58
        %v612 = vpop.permute.xlu0 %611
        %613 = vrot.lane.b32.xlu0 %v596, 58
        %v614 = vpop.permute.xlu0 %613
        %v615 = vrot.slane %v604, 4
        %v616 = vrot.slane %v606, 4
        %v617 = vrot.slane %v608, 4
        %v618 = vrot.slane %v610, 4
        %v619 = vrot.slane %v612, 4
        %v620 = vrot.slane %v614, 4
        %v621 = vsel %vm338, %v615, %v616
        %vm622 = vcmask 474112
        %v623 = vsel %vm622, %v604, %v621
        %v624 = vsel %vm338, %v616, %v617
        %v625 = vsel %vm622, %v606, %v624
        %v626 = vsel %vm338, %v618, %v619
        %v627 = vsel %vm622, %v610, %v626
        %v628 = vsel %vm338, %v619, %v620
        %v629 = vsel %vm622, %v612, %v628
        %634 = vst [vmem:[#allocation2 + $0xe0] sm:$0xff] %v623
        %635 = vst [vmem:[#allocation2 + $0xe8] sm:$0xff] %v625
        %636 = vst [vmem:[#allocation2 + $0xf0] sm:$0xff] %v627
        %637 = vst [vmem:[#allocation2 + $0xf8] sm:$0xff] %v629
        %v638 = vld [vmem:[%s267] sm:$0xff]
        %v639 = vld [vmem:[%s267 + $0x8] sm:$0xff]
        %v640 = vld [vmem:[%s267 + $0x10] sm:$0xf]
        %v641 = vld [vmem:[%s267 + $0x18] sm:$0xff]
        %v642 = vld [vmem:[%s267 + $0x20] sm:$0xff]
        %v643 = vld [vmem:[%s267 + $0x28] sm:$0xf]
        %650 = vrot.lane.b32.xlu0 %v638, 40
        %v651 = vpop.permute.xlu0 %650
        %652 = vrot.lane.b32.xlu0 %v639, 40
        %v653 = vpop.permute.xlu0 %652
        %654 = vrot.lane.b32.xlu0 %v640, 40
        %v655 = vpop.permute.xlu0 %654
        %656 = vrot.lane.b32.xlu0 %v641, 40
        %v657 = vpop.permute.xlu0 %656
        %658 = vrot.lane.b32.xlu0 %v642, 40
        %v659 = vpop.permute.xlu0 %658
        %660 = vrot.lane.b32.xlu0 %v643, 40
        %v661 = vpop.permute.xlu0 %660
        %v662 = vrot.slane %v651, 4
        %v663 = vrot.slane %v653, 4
        %v664 = vrot.slane %v655, 4
        %v665 = vrot.slane %v657, 4
        %v666 = vrot.slane %v659, 4
        %v667 = vrot.slane %v661, 4
        %v668 = vsel %vm338, %v662, %v663
        %vm669 = vcmask 326656
        %v670 = vsel %vm669, %v651, %v668
        %v671 = vsel %vm338, %v663, %v664
        %v672 = vsel %vm669, %v653, %v671
        %v673 = vsel %vm338, %v665, %v666
        %v674 = vsel %vm669, %v657, %v673
        %v675 = vsel %vm338, %v666, %v667
        %v676 = vsel %vm669, %v659, %v675
        %681 = vst [vmem:[#allocation2 + $0x100] sm:$0xff] %v670
        %682 = vst [vmem:[#allocation2 + $0x108] sm:$0xff] %v672
        %683 = vst [vmem:[#allocation2 + $0x110] sm:$0xff] %v674
        %684 = vst [vmem:[#allocation2 + $0x118] sm:$0xff] %v676
        %v685 = vld [vmem:[%s267] sm:$0xff]
        %v686 = vld [vmem:[%s267 + $0x8] sm:$0xff]
        %v687 = vld [vmem:[%s267 + $0x10] sm:$0xf]
        %v688 = vld [vmem:[%s267 + $0x18] sm:$0xff]
        %v689 = vld [vmem:[%s267 + $0x20] sm:$0xff]
        %v690 = vld [vmem:[%s267 + $0x28] sm:$0xf]
        %697 = vrot.lane.b32.xlu0 %v685, 36
        %v698 = vpop.permute.xlu0 %697
        %699 = vrot.lane.b32.xlu0 %v686, 36
        %v700 = vpop.permute.xlu0 %699
        %701 = vrot.lane.b32.xlu0 %v687, 36
        %v702 = vpop.permute.xlu0 %701
        %703 = vrot.lane.b32.xlu0 %v688, 36
        %v704 = vpop.permute.xlu0 %703
        %705 = vrot.lane.b32.xlu0 %v689, 36
        %v706 = vpop.permute.xlu0 %705
        %707 = vrot.lane.b32.xlu0 %v690, 36
        %v708 = vpop.permute.xlu0 %707
        %v709 = vrot.slane %v698, 4
        %v710 = vrot.slane %v700, 4
        %v711 = vrot.slane %v702, 4
        %v712 = vrot.slane %v704, 4
        %v713 = vrot.slane %v706, 4
        %v714 = vrot.slane %v708, 4
        %v715 = vsel %vm338, %v709, %v710
        %vm716 = vcmask 293888
        %v717 = vsel %vm716, %v698, %v715
        %v718 = vsel %vm338, %v710, %v711
        %v719 = vsel %vm716, %v700, %v718
        %v720 = vsel %vm338, %v712, %v713
        %v721 = vsel %vm716, %v704, %v720
        %v722 = vsel %vm338, %v713, %v714
        %v723 = vsel %vm716, %v706, %v722
        %728 = vst [vmem:[#allocation2 + $0x120] sm:$0xff] %v717
        %729 = vst [vmem:[#allocation2 + $0x128] sm:$0xff] %v719
        %730 = vst [vmem:[#allocation2 + $0x130] sm:$0xff] %v721
        %731 = vst [vmem:[#allocation2 + $0x138] sm:$0xff] %v723
        %v732 = vld [vmem:[%s267] sm:$0xff]
        %v733 = vld [vmem:[%s267 + $0x8] sm:$0xff]
        %v734 = vld [vmem:[%s267 + $0x10] sm:$0xf]
        %v735 = vld [vmem:[%s267 + $0x18] sm:$0xff]
        %v736 = vld [vmem:[%s267 + $0x20] sm:$0xff]
        %v737 = vld [vmem:[%s267 + $0x28] sm:$0xf]
        %744 = vrot.lane.b32.xlu0 %v732, 18
        %v745 = vpop.permute.xlu0 %744
        %746 = vrot.lane.b32.xlu0 %v733, 18
        %v747 = vpop.permute.xlu0 %746
        %748 = vrot.lane.b32.xlu0 %v734, 18
        %v749 = vpop.permute.xlu0 %748
        %750 = vrot.lane.b32.xlu0 %v735, 18
        %v751 = vpop.permute.xlu0 %750
        %752 = vrot.lane.b32.xlu0 %v736, 18
        %v753 = vpop.permute.xlu0 %752
        %754 = vrot.lane.b32.xlu0 %v737, 18
        %v755 = vpop.permute.xlu0 %754
        %v756 = vrot.slane %v745, 4
        %v757 = vrot.slane %v747, 4
        %v758 = vrot.slane %v749, 4
        %v759 = vrot.slane %v751, 4
        %v760 = vrot.slane %v753, 4
        %v761 = vrot.slane %v755, 4
        %v762 = vsel %vm338, %v756, %v757
        %vm763 = vcmask 146432
        %v764 = vsel %vm763, %v745, %v762
        %v765 = vsel %vm338, %v757, %v758
        %v766 = vsel %vm763, %v747, %v765
        %v767 = vsel %vm338, %v759, %v760
        %v768 = vsel %vm763, %v751, %v767
        %v769 = vsel %vm338, %v760, %v761
        %v770 = vsel %vm763, %v753, %v769
        %775 = vst [vmem:[#allocation2 + $0x140] sm:$0xff] %v764
        %776 = vst [vmem:[#allocation2 + $0x148] sm:$0xff] %v766
        %777 = vst [vmem:[#allocation2 + $0x150] sm:$0xff] %v768
        %778 = vst [vmem:[#allocation2 + $0x158] sm:$0xff] %v770
        %v779 = vld [vmem:[%s267] sm:$0xff]
        %v780 = vld [vmem:[%s267 + $0x8] sm:$0xff]
        %v781 = vld [vmem:[%s267 + $0x10] sm:$0xf]
        %v782 = vld [vmem:[%s267 + $0x18] sm:$0xff]
        %v783 = vld [vmem:[%s267 + $0x20] sm:$0xff]
        %v784 = vld [vmem:[%s267 + $0x28] sm:$0xf]
        %791 = vrot.lane.b32.xlu0 %v779, 14
        %v792 = vpop.permute.xlu0 %791
        %793 = vrot.lane.b32.xlu0 %v780, 14
        %v794 = vpop.permute.xlu0 %793
        %795 = vrot.lane.b32.xlu0 %v781, 14
        %v796 = vpop.permute.xlu0 %795
        %797 = vrot.lane.b32.xlu0 %v782, 14
        %v798 = vpop.permute.xlu0 %797
        %799 = vrot.lane.b32.xlu0 %v783, 14
        %v800 = vpop.permute.xlu0 %799
        %801 = vrot.lane.b32.xlu0 %v784, 14
        %v802 = vpop.permute.xlu0 %801
        %v803 = vrot.slane %v792, 4
        %v804 = vrot.slane %v794, 4
        %v805 = vrot.slane %v796, 4
        %v806 = vrot.slane %v798, 4
        %v807 = vrot.slane %v800, 4
        %v808 = vrot.slane %v802, 4
        %v809 = vsel %vm338, %v803, %v804
        %vm810 = vcmask 113664
        %v811 = vsel %vm810, %v792, %v809
        %v812 = vsel %vm338, %v804, %v805
        %v813 = vsel %vm810, %v794, %v812
        %v814 = vsel %vm338, %v806, %v807
        %v815 = vsel %vm810, %v798, %v814
        %v816 = vsel %vm338, %v807, %v808
        %v817 = vsel %vm810, %v800, %v816
        %822 = vst [vmem:[#allocation2 + $0x160] sm:$0xff] %v811
        %823 = vst [vmem:[#allocation2 + $0x168] sm:$0xff] %v813
        %824 = vst [vmem:[#allocation2 + $0x170] sm:$0xff] %v815
        %825 = vst [vmem:[#allocation2 + $0x178] sm:$0xff] %v817
        %v826 = vld [vmem:[%s267 + $0x4] sm:$0xff]
        %v827 = vld [vmem:[%s267 + $0xc] sm:$0xff]
        %v828 = vld [vmem:[%s267 + $0x14] sm:$0xf]
        %v829 = vld [vmem:[%s267 + $0x1c] sm:$0xff]
        %v830 = vld [vmem:[%s267 + $0x24] sm:$0xff]
        %v831 = vld [vmem:[%s267 + $0x2c] sm:$0xf]
        %838 = vrot.lane.b32.xlu0 %v826, 124
        %v839 = vpop.permute.xlu0 %838
        %840 = vrot.lane.b32.xlu0 %v827, 124
        %v841 = vpop.permute.xlu0 %840
        %842 = vrot.lane.b32.xlu0 %v828, 124
        %v843 = vpop.permute.xlu0 %842
        %844 = vrot.lane.b32.xlu0 %v829, 124
        %v845 = vpop.permute.xlu0 %844
        %846 = vrot.lane.b32.xlu0 %v830, 124
        %v847 = vpop.permute.xlu0 %846
        %848 = vrot.lane.b32.xlu0 %v831, 124
        %v849 = vpop.permute.xlu0 %848
        %v850 = vrot.slane %v839, 4
        %v851 = vrot.slane %v841, 4
        %v852 = vrot.slane %v843, 4
        %v853 = vrot.slane %v845, 4
        %v854 = vrot.slane %v847, 4
        %v855 = vrot.slane %v849, 4
        %v856 = vsel %vm338, %v850, %v851
        %v857 = vsel %vm340, %v839, %v856
        %v858 = vsel %vm338, %v851, %v852
        %v859 = vsel %vm340, %v841, %v858
        %v860 = vsel %vm338, %v853, %v854
        %v861 = vsel %vm340, %v845, %v860
        %v862 = vsel %vm338, %v854, %v855
        %v863 = vsel %vm340, %v847, %v862
        %868 = vst [vmem:[#allocation2 + $0x180] sm:$0xff] %v857
        %869 = vst [vmem:[#allocation2 + $0x188] sm:$0xff] %v859
        %870 = vst [vmem:[#allocation2 + $0x190] sm:$0xff] %v861
        %871 = vst [vmem:[#allocation2 + $0x198] sm:$0xff] %v863
        %v872 = vld [vmem:[%s267 + $0x4] sm:$0xff]
        %v873 = vld [vmem:[%s267 + $0xc] sm:$0xff]
        %v874 = vld [vmem:[%s267 + $0x14] sm:$0xf]
        %v875 = vld [vmem:[%s267 + $0x1c] sm:$0xff]
        %v876 = vld [vmem:[%s267 + $0x24] sm:$0xff]
        %v877 = vld [vmem:[%s267 + $0x2c] sm:$0xf]
        %884 = vrot.lane.b32.xlu0 %v872, 120
        %v885 = vpop.permute.xlu0 %884
        %886 = vrot.lane.b32.xlu0 %v873, 120
        %v887 = vpop.permute.xlu0 %886
        %888 = vrot.lane.b32.xlu0 %v874, 120
        %v889 = vpop.permute.xlu0 %888
        %890 = vrot.lane.b32.xlu0 %v875, 120
        %v891 = vpop.permute.xlu0 %890
        %892 = vrot.lane.b32.xlu0 %v876, 120
        %v893 = vpop.permute.xlu0 %892
        %894 = vrot.lane.b32.xlu0 %v877, 120
        %v895 = vpop.permute.xlu0 %894
        %v896 = vrot.slane %v885, 4
        %v897 = vrot.slane %v887, 4
        %v898 = vrot.slane %v889, 4
        %v899 = vrot.slane %v891, 4
        %v900 = vrot.slane %v893, 4
        %v901 = vrot.slane %v895, 4
        %v902 = vsel %vm338, %v896, %v897
        %vm903 = vcmask 982016
        %v904 = vsel %vm903, %v885, %v902
        %v905 = vsel %vm338, %v897, %v898
        %v906 = vsel %vm903, %v887, %v905
        %v907 = vsel %vm338, %v899, %v900
        %v908 = vsel %vm903, %v891, %v907
        %v909 = vsel %vm338, %v900, %v901
        %v910 = vsel %vm903, %v893, %v909
        %915 = vst [vmem:[#allocation2 + $0x1a0] sm:$0xff] %v904
        %916 = vst [vmem:[#allocation2 + $0x1a8] sm:$0xff] %v906
        %917 = vst [vmem:[#allocation2 + $0x1b0] sm:$0xff] %v908
        %918 = vst [vmem:[#allocation2 + $0x1b8] sm:$0xff] %v910
        %v919 = vld [vmem:[%s1] sm:$0xff]
        %v920 = vld [vmem:[%s1 + $0x8] sm:$0x33]
        %v921 = vld [vmem:[#allocation2] sm:$0xff]
        %v922 = vld [vmem:[#allocation2 + $0x8] sm:$0xff]
        %v923 = vld [vmem:[#allocation2 + $0x10] sm:$0xff]
        %v924 = vld [vmem:[#allocation2 + $0x18] sm:$0xff]
        %v925 = vld [vmem:[#allocation2 + $0x20] sm:$0xff]
        %v926 = vld [vmem:[#allocation2 + $0x28] sm:$0xff]
        %v927 = vld [vmem:[#allocation2 + $0x30] sm:$0xff]
        %v928 = vld [vmem:[#allocation2 + $0x38] sm:$0xff]
        %v929 = vld [vmem:[#allocation2 + $0x40] sm:$0xff]
        %v930 = vld [vmem:[#allocation2 + $0x48] sm:$0xff]
        %v931 = vld [vmem:[#allocation2 + $0x50] sm:$0xff]
        %v932 = vld [vmem:[#allocation2 + $0x58] sm:$0xff]
        %v933 = vld [vmem:[#allocation2 + $0x60] sm:$0xff]
        %v934 = vld [vmem:[#allocation2 + $0x68] sm:$0xff]
        %v935 = vld [vmem:[#allocation2 + $0x70] sm:$0xff]
        %v936 = vld [vmem:[#allocation2 + $0x78] sm:$0xff]
        %v937 = vld [vmem:[#allocation2 + $0x80] sm:$0xff]
        %v938 = vld [vmem:[#allocation2 + $0x88] sm:$0xff]
        %v939 = vld [vmem:[#allocation2 + $0x90] sm:$0xff]
        %v940 = vld [vmem:[#allocation2 + $0x98] sm:$0xff]
        %v941 = vld [vmem:[#allocation2 + $0xa0] sm:$0xff]
        %v942 = vld [vmem:[#allocation2 + $0xa8] sm:$0xff]
        %v943 = vld [vmem:[#allocation2 + $0xb0] sm:$0xff]
        %v944 = vld [vmem:[#allocation2 + $0xb8] sm:$0xff]
        %v945 = vld [vmem:[#allocation2 + $0xc0] sm:$0xff]
        %v946 = vld [vmem:[#allocation2 + $0xc8] sm:$0xff]
        %v947 = vld [vmem:[#allocation2 + $0xd0] sm:$0xff]
        %v948 = vld [vmem:[#allocation2 + $0xd8] sm:$0xff]
        %v949 = vld [vmem:[#allocation2 + $0xe0] sm:$0xff]
        %v950 = vld [vmem:[#allocation2 + $0xe8] sm:$0xff]
        %v951 = vld [vmem:[#allocation2 + $0xf0] sm:$0xff]
        %v952 = vld [vmem:[#allocation2 + $0xf8] sm:$0xff]
        %v953 = vld [vmem:[#allocation2 + $0x100] sm:$0xff]
        %v954 = vld [vmem:[#allocation2 + $0x108] sm:$0xff]
        %v955 = vld [vmem:[#allocation2 + $0x110] sm:$0xff]
        %v956 = vld [vmem:[#allocation2 + $0x118] sm:$0xff]
        %v957 = vld [vmem:[#allocation2 + $0x120] sm:$0xff]
        %v958 = vld [vmem:[#allocation2 + $0x128] sm:$0xff]
        %v959 = vld [vmem:[#allocation2 + $0x130] sm:$0xff]
        %v960 = vld [vmem:[#allocation2 + $0x138] sm:$0xff]
        %v961 = vld [vmem:[#allocation2 + $0x140] sm:$0xff]
        %v962 = vld [vmem:[#allocation2 + $0x148] sm:$0xff]
        %v963 = vld [vmem:[#allocation2 + $0x150] sm:$0xff]
        %v964 = vld [vmem:[#allocation2 + $0x158] sm:$0xff]
        %v965 = vld [vmem:[#allocation2 + $0x160] sm:$0xff]
        %v966 = vld [vmem:[#allocation2 + $0x168] sm:$0xff]
        %v967 = vld [vmem:[#allocation2 + $0x170] sm:$0xff]
        %v968 = vld [vmem:[#allocation2 + $0x178] sm:$0xff]
        %v969 = vld [vmem:[#allocation2 + $0x180] sm:$0xff]
        %v970 = vld [vmem:[#allocation2 + $0x188] sm:$0xff]
        %v971 = vld [vmem:[#allocation2 + $0x190] sm:$0xff]
        %v972 = vld [vmem:[#allocation2 + $0x198] sm:$0xff]
        %v973 = vld [vmem:[#allocation2 + $0x1a0] sm:$0xff]
        %v974 = vld [vmem:[#allocation2 + $0x1a8] sm:$0xff]
        %v975 = vld [vmem:[#allocation2 + $0x1b0] sm:$0xff]
        %v976 = vld [vmem:[#allocation2 + $0x1b8] sm:$0xff]
        %v979 = vunpack.c.l.b16 %v919
        %v980 = vunpack.c.h.b16 %v919
        %v981 = vunpack.c.l.b16 %v920
        %v982 = vunpack.c.h.b16 %v920
        %v983 = vpack.c.b16 %v981, %v979
        %v984 = vpack.c.b16 %v982, %v980
        %v1042 = vunpack.c.l.b16 %v921
        %v1043 = vunpack.c.h.b16 %v921
        %v1044 = vunpack.c.l.b16 %v922
        %v1045 = vunpack.c.h.b16 %v922
        %v1046 = vunpack.c.l.b16 %v923
        %v1047 = vunpack.c.h.b16 %v923
        %v1048 = vunpack.c.l.b16 %v924
        %v1049 = vunpack.c.h.b16 %v924
        %v1050 = vunpack.c.l.b16 %v925
        %v1051 = vunpack.c.h.b16 %v925
        %v1052 = vunpack.c.l.b16 %v926
        %v1053 = vunpack.c.h.b16 %v926
        %v1054 = vunpack.c.l.b16 %v927
        %v1055 = vunpack.c.h.b16 %v927
        %v1056 = vunpack.c.l.b16 %v928
        %v1057 = vunpack.c.h.b16 %v928
        %v1058 = vunpack.c.l.b16 %v929
        %v1059 = vunpack.c.h.b16 %v929
        %v1060 = vunpack.c.l.b16 %v930
        %v1061 = vunpack.c.h.b16 %v930
        %v1062 = vunpack.c.l.b16 %v931
        %v1063 = vunpack.c.h.b16 %v931
        %v1064 = vunpack.c.l.b16 %v932
        %v1065 = vunpack.c.h.b16 %v932
        %v1066 = vunpack.c.l.b16 %v933
        %v1067 = vunpack.c.h.b16 %v933
        %v1068 = vunpack.c.l.b16 %v934
        %v1069 = vunpack.c.h.b16 %v934
        %v1070 = vunpack.c.l.b16 %v935
        %v1071 = vunpack.c.h.b16 %v935
        %v1072 = vunpack.c.l.b16 %v936
        %v1073 = vunpack.c.h.b16 %v936
        %v1074 = vunpack.c.l.b16 %v937
        %v1075 = vunpack.c.h.b16 %v937
        %v1076 = vunpack.c.l.b16 %v938
        %v1077 = vunpack.c.h.b16 %v938
        %v1078 = vunpack.c.l.b16 %v939
        %v1079 = vunpack.c.h.b16 %v939
        %v1080 = vunpack.c.l.b16 %v940
        %v1081 = vunpack.c.h.b16 %v940
        %v1082 = vunpack.c.l.b16 %v941
        %v1083 = vunpack.c.h.b16 %v941
        %v1084 = vunpack.c.l.b16 %v942
        %v1085 = vunpack.c.h.b16 %v942
        %v1086 = vunpack.c.l.b16 %v943
        %v1087 = vunpack.c.h.b16 %v943
        %v1088 = vunpack.c.l.b16 %v944
        %v1089 = vunpack.c.h.b16 %v944
        %v1090 = vunpack.c.l.b16 %v945
        %v1091 = vunpack.c.h.b16 %v945
        %v1092 = vunpack.c.l.b16 %v946
        %v1093 = vunpack.c.h.b16 %v946
        %v1094 = vunpack.c.l.b16 %v947
        %v1095 = vunpack.c.h.b16 %v947
        %v1096 = vunpack.c.l.b16 %v948
        %v1097 = vunpack.c.h.b16 %v948
        %v1098 = vunpack.c.l.b16 %v949
        %v1099 = vunpack.c.h.b16 %v949
        %v1100 = vunpack.c.l.b16 %v950
        %v1101 = vunpack.c.h.b16 %v950
        %v1102 = vunpack.c.l.b16 %v951
        %v1103 = vunpack.c.h.b16 %v951
        %v1104 = vunpack.c.l.b16 %v952
        %v1105 = vunpack.c.h.b16 %v952
        %v1106 = vunpack.c.l.b16 %v953
        %v1107 = vunpack.c.h.b16 %v953
        %v1108 = vunpack.c.l.b16 %v954
        %v1109 = vunpack.c.h.b16 %v954
        %v1110 = vunpack.c.l.b16 %v955
        %v1111 = vunpack.c.h.b16 %v955
        %v1112 = vunpack.c.l.b16 %v956
        %v1113 = vunpack.c.h.b16 %v956
        %v1114 = vunpack.c.l.b16 %v957
        %v1115 = vunpack.c.h.b16 %v957
        %v1116 = vunpack.c.l.b16 %v958
        %v1117 = vunpack.c.h.b16 %v958
        %v1118 = vunpack.c.l.b16 %v959
        %v1119 = vunpack.c.h.b16 %v959
        %v1120 = vunpack.c.l.b16 %v960
        %v1121 = vunpack.c.h.b16 %v960
        %v1122 = vunpack.c.l.b16 %v961
        %v1123 = vunpack.c.h.b16 %v961
        %v1124 = vunpack.c.l.b16 %v962
        %v1125 = vunpack.c.h.b16 %v962
        %v1126 = vunpack.c.l.b16 %v963
        %v1127 = vunpack.c.h.b16 %v963
        %v1128 = vunpack.c.l.b16 %v964
        %v1129 = vunpack.c.h.b16 %v964
        %v1130 = vunpack.c.l.b16 %v965
        %v1131 = vunpack.c.h.b16 %v965
        %v1132 = vunpack.c.l.b16 %v966
        %v1133 = vunpack.c.h.b16 %v966
        %v1134 = vunpack.c.l.b16 %v967
        %v1135 = vunpack.c.h.b16 %v967
        %v1136 = vunpack.c.l.b16 %v968
        %v1137 = vunpack.c.h.b16 %v968
        %v1138 = vunpack.c.l.b16 %v969
        %v1139 = vunpack.c.h.b16 %v969
        %v1140 = vunpack.c.l.b16 %v970
        %v1141 = vunpack.c.h.b16 %v970
        %v1142 = vunpack.c.l.b16 %v971
        %v1143 = vunpack.c.h.b16 %v971
        %v1144 = vunpack.c.l.b16 %v972
        %v1145 = vunpack.c.h.b16 %v972
        %v1146 = vunpack.c.l.b16 %v973
        %v1147 = vunpack.c.h.b16 %v973
        %v1148 = vunpack.c.l.b16 %v974
        %v1149 = vunpack.c.h.b16 %v974
        %v1150 = vunpack.c.l.b16 %v975
        %v1151 = vunpack.c.h.b16 %v975
        %v1152 = vunpack.c.l.b16 %v976
        %v1153 = vunpack.c.h.b16 %v976
        %v1154 = vpack.c.b16 %v1046, %v1042
        %v1155 = vpack.c.b16 %v1047, %v1043
        %v1156 = vpack.c.b16 %v1048, %v1044
        %v1157 = vpack.c.b16 %v1049, %v1045
        %v1158 = vpack.c.b16 %v1054, %v1050
        %v1159 = vpack.c.b16 %v1055, %v1051
        %v1160 = vpack.c.b16 %v1056, %v1052
        %v1161 = vpack.c.b16 %v1057, %v1053
        %v1162 = vpack.c.b16 %v1062, %v1058
        %v1163 = vpack.c.b16 %v1063, %v1059
        %v1164 = vpack.c.b16 %v1064, %v1060
        %v1165 = vpack.c.b16 %v1065, %v1061
        %v1166 = vpack.c.b16 %v1070, %v1066
        %v1167 = vpack.c.b16 %v1071, %v1067
        %v1168 = vpack.c.b16 %v1072, %v1068
        %v1169 = vpack.c.b16 %v1073, %v1069
        %v1170 = vpack.c.b16 %v1078, %v1074
        %v1171 = vpack.c.b16 %v1079, %v1075
        %v1172 = vpack.c.b16 %v1080, %v1076
        %v1173 = vpack.c.b16 %v1081, %v1077
        %v1174 = vpack.c.b16 %v1086, %v1082
        %v1175 = vpack.c.b16 %v1087, %v1083
        %v1176 = vpack.c.b16 %v1088, %v1084
        %v1177 = vpack.c.b16 %v1089, %v1085
        %v1178 = vpack.c.b16 %v1094, %v1090
        %v1179 = vpack.c.b16 %v1095, %v1091
        %v1180 = vpack.c.b16 %v1096, %v1092
        %v1181 = vpack.c.b16 %v1097, %v1093
        %v1182 = vpack.c.b16 %v1102, %v1098
        %v1183 = vpack.c.b16 %v1103, %v1099
        %v1184 = vpack.c.b16 %v1104, %v1100
        %v1185 = vpack.c.b16 %v1105, %v1101
        %v1186 = vpack.c.b16 %v1110, %v1106
        %v1187 = vpack.c.b16 %v1111, %v1107
        %v1188 = vpack.c.b16 %v1112, %v1108
        %v1189 = vpack.c.b16 %v1113, %v1109
        %v1190 = vpack.c.b16 %v1118, %v1114
        %v1191 = vpack.c.b16 %v1119, %v1115
        %v1192 = vpack.c.b16 %v1120, %v1116
        %v1193 = vpack.c.b16 %v1121, %v1117
        %v1194 = vpack.c.b16 %v1126, %v1122
        %v1195 = vpack.c.b16 %v1127, %v1123
        %v1196 = vpack.c.b16 %v1128, %v1124
        %v1197 = vpack.c.b16 %v1129, %v1125
        %v1198 = vpack.c.b16 %v1134, %v1130
        %v1199 = vpack.c.b16 %v1135, %v1131
        %v1200 = vpack.c.b16 %v1136, %v1132
        %v1201 = vpack.c.b16 %v1137, %v1133
        %v1202 = vpack.c.b16 %v1142, %v1138
        %v1203 = vpack.c.b16 %v1143, %v1139
        %v1204 = vpack.c.b16 %v1144, %v1140
        %v1205 = vpack.c.b16 %v1145, %v1141
        %v1206 = vpack.c.b16 %v1150, %v1146
        %v1207 = vpack.c.b16 %v1151, %v1147
        %v1208 = vpack.c.b16 %v1152, %v1148
        %v1209 = vpack.c.b16 %v1153, %v1149
        %vm1266 = vcmask 785408
        %v1268 = vsel %vm1266, %v984, 0
        %1270 = vmatpush.bf16.msra.mxu0 %v1182
        %1271 = vmatpush.bf16.msra.mxu0 %v1178
        %1272 = vmatpush.bf16.msra.mxu0 %v1174
        %1273 = vmatpush.bf16.msra.mxu0 %v1170
        %1274 = vmatpush.bf16.msra.mxu0 %v1166
        %1275 = vmatpush.bf16.msra.mxu0 %v1162
        %1276 = vmatpush.bf16.msra.mxu0 %v1158
        %1277 = vmatpush.bf16.msra.mxu0 %v1154
        %1278 = vmatmul.bf16.gmra.mxu0 %v983
        %v1279 = vpop.f32.mrf.mxu0
        %v1280 = vadd.f32 0.0, %v1279
        %v1281 = vpop.f32.mrf.mxu0
        %v1282 = vadd.f32 0.0, %v1281
        %1283 = vdwg.mxu0
        %1284 = vmatpush.bf16.msra.mxu0 0
        %1285 = vmatpush.bf16.msra.mxu0 0
        %1286 = vmatpush.bf16.msra.mxu0 %v1206
        %1287 = vmatpush.bf16.msra.mxu0 %v1202
        %1288 = vmatpush.bf16.msra.mxu0 %v1198
        %1289 = vmatpush.bf16.msra.mxu0 %v1194
        %1290 = vmatpush.bf16.msra.mxu0 %v1190
        %1291 = vmatpush.bf16.msra.mxu0 %v1186
        %1292 = vmatmul.bf16.gmra.mxu0 %v1268
        %v1293 = vpop.f32.mrf.mxu0
        %v1294 = vadd.f32 %v1280, %v1293
        %v1295 = vpop.f32.mrf.mxu0
        %v1296 = vadd.f32 %v1282, %v1295
        %1297 = vdwg.mxu0
        %1298 = vmatpush.bf16.msra.mxu0 %v1183
        %1299 = vmatpush.bf16.msra.mxu0 %v1179
        %1300 = vmatpush.bf16.msra.mxu0 %v1175
        %1301 = vmatpush.bf16.msra.mxu0 %v1171
        %1302 = vmatpush.bf16.msra.mxu0 %v1167
        %1303 = vmatpush.bf16.msra.mxu0 %v1163
        %1304 = vmatpush.bf16.msra.mxu0 %v1159
        %1305 = vmatpush.bf16.msra.mxu0 %v1155
        %1306 = vmatmul.bf16.gmra.mxu0 %v983
        %v1307 = vpop.f32.mrf.mxu0
        %v1308 = vadd.f32 0.0, %v1307
        %v1309 = vpop.f32.mrf.mxu0
        %v1310 = vadd.f32 0.0, %v1309
        %1311 = vdwg.mxu0
        %1312 = vmatpush.bf16.msra.mxu0 0
        %1313 = vmatpush.bf16.msra.mxu0 0
        %1314 = vmatpush.bf16.msra.mxu0 %v1207
        %1315 = vmatpush.bf16.msra.mxu0 %v1203
        %1316 = vmatpush.bf16.msra.mxu0 %v1199
        %1317 = vmatpush.bf16.msra.mxu0 %v1195
        %1318 = vmatpush.bf16.msra.mxu0 %v1191
        %1319 = vmatpush.bf16.msra.mxu0 %v1187
        %1320 = vmatmul.bf16.gmra.mxu0 %v1268
        %v1321 = vpop.f32.mrf.mxu0
        %v1322 = vadd.f32 %v1308, %v1321
        %v1323 = vpop.f32.mrf.mxu0
        %v1324 = vadd.f32 %v1310, %v1323
        %1325 = vdwg.mxu0
        %1326 = vmatpush.bf16.msra.mxu0 %v1184
        %1327 = vmatpush.bf16.msra.mxu0 %v1180
        %1328 = vmatpush.bf16.msra.mxu0 %v1176
        %1329 = vmatpush.bf16.msra.mxu0 %v1172
        %1330 = vmatpush.bf16.msra.mxu0 %v1168
        %1331 = vmatpush.bf16.msra.mxu0 %v1164
        %1332 = vmatpush.bf16.msra.mxu0 %v1160
        %1333 = vmatpush.bf16.msra.mxu0 %v1156
        %1334 = vmatmul.bf16.gmra.mxu0 %v983
        %v1335 = vpop.f32.mrf.mxu0
        %v1336 = vadd.f32 0.0, %v1335
        %v1337 = vpop.f32.mrf.mxu0
        %v1338 = vadd.f32 0.0, %v1337
        %1339 = vdwg.mxu0
        %1340 = vmatpush.bf16.msra.mxu0 0
        %1341 = vmatpush.bf16.msra.mxu0 0
        %1342 = vmatpush.bf16.msra.mxu0 %v1208
        %1343 = vmatpush.bf16.msra.mxu0 %v1204
        %1344 = vmatpush.bf16.msra.mxu0 %v1200
        %1345 = vmatpush.bf16.msra.mxu0 %v1196
        %1346 = vmatpush.bf16.msra.mxu0 %v1192
        %1347 = vmatpush.bf16.msra.mxu0 %v1188
        %1348 = vmatmul.bf16.gmra.mxu0 %v1268
        %v1349 = vpop.f32.mrf.mxu0
        %v1350 = vadd.f32 %v1336, %v1349
        %v1351 = vpop.f32.mrf.mxu0
        %v1352 = vadd.f32 %v1338, %v1351
        %1353 = vdwg.mxu0
        %1354 = vmatpush.bf16.msra.mxu0 %v1185
        %1355 = vmatpush.bf16.msra.mxu0 %v1181
        %1356 = vmatpush.bf16.msra.mxu0 %v1177
        %1357 = vmatpush.bf16.msra.mxu0 %v1173
        %1358 = vmatpush.bf16.msra.mxu0 %v1169
        %1359 = vmatpush.bf16.msra.mxu0 %v1165
        %1360 = vmatpush.bf16.msra.mxu0 %v1161
        %1361 = vmatpush.bf16.msra.mxu0 %v1157
        %1362 = vmatmul.bf16.gmra.mxu0 %v983
        %v1363 = vpop.f32.mrf.mxu0
        %v1364 = vadd.f32 0.0, %v1363
        %v1365 = vpop.f32.mrf.mxu0
        %v1366 = vadd.f32 0.0, %v1365
        %1367 = vdwg.mxu0
        %1368 = vmatpush.bf16.msra.mxu0 0
        %1369 = vmatpush.bf16.msra.mxu0 0
        %1370 = vmatpush.bf16.msra.mxu0 %v1209
        %1371 = vmatpush.bf16.msra.mxu0 %v1205
        %1372 = vmatpush.bf16.msra.mxu0 %v1201
        %1373 = vmatpush.bf16.msra.mxu0 %v1197
        %1374 = vmatpush.bf16.msra.mxu0 %v1193
        %1375 = vmatpush.bf16.msra.mxu0 %v1189
        %1376 = vmatmul.bf16.gmra.mxu0 %v1268
        %v1377 = vpop.f32.mrf.mxu0
        %v1378 = vadd.f32 %v1364, %v1377
        %v1379 = vpop.f32.mrf.mxu0
        %v1380 = vadd.f32 %v1366, %v1379
        %1381 = vdwg.mxu0
        %v1382 = vld [vmem:[%s2] sm:$0xff]
        %v1383 = vld [vmem:[%s2 + $0x8] sm:$0xf]
        %1385 = vset.pattern.permute.xlu0 0
        %1386 = vperm.xlu0 %1385, %v1382
        %v1387 = vpop.permute.xlu0 %1386
        %1390 = vset.pattern.permute.xlu0 0
        %1391 = vperm.xlu0 %1390, %v1383
        %v1392 = vpop.permute.xlu0 %1391
        %v1394 = vmul.f32 %v1294, %v1387
        %v1395 = vmul.f32 %v1322, %v1387
        %v1396 = vmul.f32 %v1350, %v1387
        %v1397 = vmul.f32 %v1378, %v1387
        %v1398 = vmul.f32 %v1296, %v1392
        %v1399 = vmul.f32 %v1324, %v1392
        %v1400 = vmul.f32 %v1352, %v1392
        %v1401 = vmul.f32 %v1380, %v1392
        %v1402 = vld [vmem:[%s3] sm:$0xff]
        %v1403 = vld [vmem:[%s3 + $0x8] sm:$0xf]
        %1405 = vset.pattern.permute.xlu0 0
        %1406 = vperm.xlu0 %1405, %v1402
        %v1407 = vpop.permute.xlu0 %1406
        %1410 = vset.pattern.permute.xlu0 0
        %1411 = vperm.xlu0 %1410, %v1403
        %v1412 = vpop.permute.xlu0 %1411
        %v1414 = vadd.f32 %v1394, %v1407
        %v1415 = vadd.f32 %v1395, %v1407
        %v1416 = vadd.f32 %v1396, %v1407
        %v1417 = vadd.f32 %v1397, %v1407
        %v1418 = vadd.f32 %v1398, %v1412
        %v1419 = vadd.f32 %v1399, %v1412
        %v1420 = vadd.f32 %v1400, %v1412
        %v1421 = vadd.f32 %v1401, %v1412
        %v1422 = vmax.f32 %v1414, 0.0
        %v1423 = vmax.f32 %v1415, 0.0
        %v1424 = vmax.f32 %v1416, 0.0
        %v1425 = vmax.f32 %v1417, 0.0
        %v1426 = vmax.f32 %v1418, 0.0
        %v1427 = vmax.f32 %v1419, 0.0
        %v1428 = vmax.f32 %v1420, 0.0
        %v1429 = vmax.f32 %v1421, 0.0
        %v1430 = vpack.c.bf16 %v1423, %v1422
        %v1431 = vpack.c.bf16 %v1425, %v1424
        %v1432 = vpack.c.bf16 %v1427, %v1426
        %v1433 = vpack.c.bf16 %v1429, %v1428
        %1434 = vst [vmem:[#allocation3] sm:$0xff] %v1430
        %1435 = vst [vmem:[#allocation3 + $0x8] sm:$0xff] %v1431
        %1436 = vst [vmem:[#allocation3 + $0x10] sm:$0x33] %v1432
        %1437 = vst [vmem:[#allocation3 + $0x18] sm:$0x33] %v1433
        %v1442 = vrot.slane %v1422, 4
        %v1443 = vrot.slane %v1423, 4
        %v1444 = vrot.slane %v1424, 4
        %v1445 = vrot.slane %v1425, 4
        %v1450 = vadd.f32 %v1422, %v1442
        %v1451 = vadd.f32 %v1423, %v1443
        %v1452 = vadd.f32 %v1424, %v1444
        %v1453 = vadd.f32 %v1425, %v1445
        %v1454 = vadd.f32 %v1450, %v1426
        %v1455 = vadd.f32 %v1451, %v1427
        %v1456 = vadd.f32 %v1452, %v1428
        %v1457 = vadd.f32 %v1453, %v1429
        %v1458 = vld [vmem:[%s4] sm:$0xf]
        %v1460 = vperm.slane %v1458, 0
        %v1461 = vperm.slane %v1458, 1
        %v1462 = vperm.slane %v1458, 2
        %v1463 = vperm.slane %v1458, 3
        %v1468 = vmul.f32 %v1454, %v1460
        %v1469 = vmul.f32 %v1455, %v1461
        %v1470 = vmul.f32 %v1456, %v1462
        %v1471 = vmul.f32 %v1457, %v1463
        %vm1472 = vcmask 1043456
        %v1473 = vsel %vm1472, %v1468, 0.0
        %v1474 = vsel %vm1472, %v1469, 0.0
        %v1475 = vadd.f32 %v1473, %v1474
        %v1476 = vsel %vm1472, %v1470, 0.0
        %v1477 = vadd.f32 %v1475, %v1476
        %v1478 = vsel %vm1472, %v1471, 0.0
        %v1479 = vadd.f32 %v1477, %v1478
        %1480 = vadd.xlane.f32.xlu0 %v1479
        %v1481 = vpop.xlane.xlu0 %1480
        %v1482 = vmul.f32 %v1481, 0.00390625
        %v1483 = vld [vmem:[%s5] sm:$0xff]
        %v1484 = vld [vmem:[%s5 + $0x8] sm:$0xf]
        %v1485 = vld [vmem:[%s6] sm:$0xff]
        %v1486 = vld [vmem:[%s6 + $0x8] sm:$0xf]
        %vm1487 = vcmask 31744
        %v1489 = vsel %vm1487, %v1483, 0
        %v1492 = vsel %vm1487, %v1484, 0
        %v1495 = vsel %vm1472, %v1482, 0
        %1497 = vmatpush.msra.mxu0 0.0
        %1498 = vmatpush.msra.mxu0 0.0
        %1499 = vmatpush.msra.mxu0 0.0
        %1500 = vmatpush.msra.mxu0 0.0
        %1501 = vmatpush.msra.mxu0 0.0
        %1502 = vmatpush.msra.mxu0 0.0
        %1503 = vmatpush.msra.mxu0 0.0
        %1504 = vmatpush.msra.mxu0 0.0
        %1505 = vmatpush.msra.mxu0 0.0
        %1506 = vmatpush.msra.mxu0 0.0
        %1507 = vmatpush.msra.mxu0 0.0
        %1508 = vmatpush.msra.mxu0 0.0
        %1509 = vmatpush.msra.mxu0 0.0
        %1510 = vmatpush.msra.mxu0 0.0
        %1511 = vmatpush.msra.mxu0 0.0
        %1512 = vmatpush.msra.mxu0 %v1495
        %1513 = vmatmul.f32.gmra.mxu0 %v1489
        %v1514 = vpop.f32.mrf.mxu0
        %v1515 = vadd.f32 %v1485, %v1514
        %1516 = vmatmul.f32.gmra.mxu0 %v1492
        %v1517 = vpop.f32.mrf.mxu0
        %v1518 = vadd.f32 %v1486, %v1517
        %1519 = vdwg.mxu0
        %v1521 = vrot.slane %v1515, 4
        %v1523 = vmax.f32 %v1515, %v1521
        %v1524 = vmax.f32 %v1523, %v1518
        %v1525 = vsub.f32 %v1515, %v1524
        %v1526 = vmul.f32 %v1525, 1.442695
        %v1527 = vpow.pop %v1526
        %v1529 = vrot.slane %v1524, 4
        %v1531 = vsub.f32 %v1515, %v1529
        %v1532 = vmul.f32 %v1531, 1.442695
        %v1533 = vpow.pop %v1532
        %v1534 = vsub.f32 %v1518, %v1524
        %v1535 = vmul.f32 %v1534, 1.442695
        %v1536 = vpow.pop %v1535
        %v1538 = vrot.slane %v1533, 4
        %v1540 = vadd.f32 %v1527, %v1538
        %v1541 = vadd.f32 %v1540, %v1536
        %v1542 = vrcp.pop %v1541
        %v1543 = vmul.f32 %v1541, %v1542
        %v1544 = vsub.f32 1.0, %v1543
        %v1545 = vmul.f32 %v1542, %v1544
        %v1546 = vadd.f32 %v1542, %v1545
        %vm1547 = vweird.f32 %v1541
        %vm1548 = vweird.f32 %v1542
        %vm1549 = vmor %vm1547, %vm1548
        %v1550 = vsel %vm1549, %v1542, %v1546
        %v1551 = vand.u32 2147483647, %v1541
        %vm1552 = vcmp.eq.f32.partialorder %v1551, 8.507059e+37
        %v1553 = vand.u32 %v1541, 2147483648
        %v1554 = vor.u32 1.1754944e-38, %v1553
        %v1555 = vsel %vm1552, %v1554, %v1550
        %v1556 = vmul.f32 %v1527, %v1555
        %v1558 = vrot.slane %v1541, 4
        %v1560 = vrcp.pop %v1558
        %v1561 = vmul.f32 %v1558, %v1560
        %v1562 = vsub.f32 1.0, %v1561
        %v1563 = vmul.f32 %v1560, %v1562
        %v1564 = vadd.f32 %v1560, %v1563
        %vm1565 = vweird.f32 %v1558
        %vm1566 = vweird.f32 %v1560
        %vm1567 = vmor %vm1565, %vm1566
        %v1568 = vsel %vm1567, %v1560, %v1564
        %v1569 = vand.u32 2147483647, %v1558
        %vm1570 = vcmp.eq.f32.partialorder %v1569, 8.507059e+37
        %v1571 = vand.u32 %v1558, 2147483648
        %v1572 = vor.u32 1.1754944e-38, %v1571
        %v1573 = vsel %vm1570, %v1572, %v1568
        %v1574 = vmul.f32 %v1533, %v1573
        %v1575 = vmul.f32 %v1536, %v1555
        %v1576 = vld [vmem:[#allocation3] sm:$0x33]
        %v1577 = vld [vmem:[#allocation3 + $0x8] sm:$0x33]
        %v1578 = vunpack.c.l.bf16 %v1576
        %v1579 = vunpack.c.h.bf16 %v1576
        %v1580 = vunpack.c.l.bf16 %v1577
        %v1581 = vunpack.c.h.bf16 %v1577
        %1583 = vset.pattern.permute.xlu0 0
        %1584 = vperm.xlu0 %1583, %v1556
        %v1585 = vpop.permute.xlu0 %1584
        %v1587 = vmul.f32 %v1578, %v1585
        %v1588 = vmul.f32 %v1579, %v1585
        %v1589 = vmul.f32 %v1580, %v1585
        %v1590 = vmul.f32 %v1581, %v1585
        %v1591 = vld [vmem:[#allocation3] sm:$0xcc]
        %v1592 = vld [vmem:[#allocation3 + $0x8] sm:$0xcc]
        %v1593 = vunpack.c.l.bf16 %v1591
        %v1594 = vunpack.c.h.bf16 %v1591
        %v1595 = vunpack.c.l.bf16 %v1592
        %v1596 = vunpack.c.h.bf16 %v1592
        %1598 = vset.pattern.permute.xlu0 0
        %1599 = vperm.xlu0 %1598, %v1574
        %v1600 = vpop.permute.xlu0 %1599
        %v1602 = vmul.f32 %v1593, %v1600
        %v1603 = vmul.f32 %v1594, %v1600
        %v1604 = vmul.f32 %v1595, %v1600
        %v1605 = vmul.f32 %v1596, %v1600
        %v1610 = vrot.slane %v1602, 4
        %v1611 = vrot.slane %v1603, 4
        %v1612 = vrot.slane %v1604, 4
        %v1613 = vrot.slane %v1605, 4
        %v1618 = vadd.f32 %v1587, %v1610
        %v1619 = vadd.f32 %v1588, %v1611
        %v1620 = vadd.f32 %v1589, %v1612
        %v1621 = vadd.f32 %v1590, %v1613
        %v1622 = vld [vmem:[#allocation3 + $0x10] sm:$0x33]
        %v1623 = vld [vmem:[#allocation3 + $0x18] sm:$0x33]
        %v1624 = vunpack.c.l.bf16 %v1622
        %v1625 = vunpack.c.h.bf16 %v1622
        %v1626 = vunpack.c.l.bf16 %v1623
        %v1627 = vunpack.c.h.bf16 %v1623
        %1629 = vset.pattern.permute.xlu0 0
        %1630 = vperm.xlu0 %1629, %v1575
        %v1631 = vpop.permute.xlu0 %1630
        %v1633 = vmul.f32 %v1624, %v1631
        %v1634 = vmul.f32 %v1625, %v1631
        %v1635 = vmul.f32 %v1626, %v1631
        %v1636 = vmul.f32 %v1627, %v1631
        %v1637 = vadd.f32 %v1618, %v1633
        %v1638 = vadd.f32 %v1619, %v1634
        %v1639 = vadd.f32 %v1620, %v1635
        %v1640 = vadd.f32 %v1621, %v1636
        %v1645 = vrot.slane %v1638, 4
        %v1646 = vrot.slane %v1640, 4
        %v1647 = vsel %vm1472, %v1637, %v1645
        %v1648 = vsel %vm1472, %v1639, %v1646
        %1651 = vst [vmem:[%s298] sm:$0xff] %v1647
        %1652 = vst [vmem:[%s298 + $0x8] sm:$0xff] %v1648
        %s1653 = sand.u32 %s184, 1
        %s1654 = scalar_lea.sflag [#allocation6], %s1653
        %s1655 = sand.u32 %s184, 1
        %s1656 = smul.addr %s1655, 16
        %s1657 = scalar_lea.vmem [#allocation7], %s1656
        // Predicated region
        $region53: #{tpu_custom_call.1} parent=47 // pred_check
          %p1658 = pneg %p194
        $region54: #{tpu_custom_call.1} parent=47 // pred_check_branch
          %1660 = sbr.rel (%p1658) target = $region56
        $region55: #{tpu_custom_call.1} parent=47 // pred_region
          %1662 = vsyncadd %s1654, 0
          %s1663 = smul.addr %s24, 4
          %s1664 = smul.addr %s1663, 4
          %s1665 = scalar_lea.hbm %s7, %s1664
          %s1667 = sshll.u32 %s1657, 4
          %s1668 = int_to_ptr.vmem [resolvable:$true] %s1667
          %s1669 = sshll.u32 %s1665, 4
          %s1670 = int_to_ptr.hbm [resolvable:$true] %s1669
          %1672 = dma.vmem_to_hbm [thread:$0]  %s1668, 256, %s1670, %s1654
        $region56: #{tpu_custom_call.1} parent=47 // pred_fallthru
          _
      $region48: #{tpu_custom_call.1} parent=5 // pred_fallthru
        _
      %p1673 = scmp.le.s32.totalorder 2, %s19
      // Predicated region
      $region57: #{tpu_custom_call.1} parent=5 // pred_check
        %p1674 = pneg %p1673
      $region58: #{tpu_custom_call.1} parent=5 // pred_check_branch
        %1676 = sbr.rel (%p1674) target = $region60
      $region59: #{tpu_custom_call.1} parent=5 // pred_region
        %s1677 = ssub.s32 %s19, 2
        // Predicated region
        $region61: #{tpu_custom_call.1} parent=59 // pred_check
          %p1678 = pneg %p200
        $region62: #{tpu_custom_call.1} parent=59 // pred_check_branch
          %1680 = sbr.rel (%p1678) target = $region64
        $region63: #{tpu_custom_call.1} parent=59 // pred_region
          %s1681 = sand.u32 %s185, 1
          %s1682 = scalar_lea.sflag [#allocation6], %s1681
          %s1683 = sand.u32 %s185, 1
          %s1684 = smul.addr %s1683, 16
          %s1685 = scalar_lea.vmem [#allocation7], %s1684
          %1687 = dma.done %s1682, 256
        $region64: #{tpu_custom_call.1} parent=59 // pred_fallthru
          _
      $region60: #{tpu_custom_call.1} parent=5 // pred_fallthru
        _
    $region6: #{tpu_custom_call.1} parent=1 // loop_footer
      %s23 = sadd.s32 1, %s19
    $region7: #{tpu_custom_call.1} parent=1 // loop_footer_branch
      %18 = sbr.rel target = $region3
    $region8: #{tpu_custom_call.1} parent=1 // loop_exit
      _
    %1688 = vsyncpa [#allocation5], 1
    %s1689 = scalar_lea.sflag [#allocation5], 1
    %1690 = vsyncpa %s1689, 1
    %1691 = vsyncpa [#allocation6], 1
    %s1692 = scalar_lea.sflag [#allocation6], 1
    %1693 = vsyncpa %s1692, 1

</llo_original>
